<compile_context>
chip_gen: v6e
topology: v6e:2x2x1
jax: 0.10.0
libtpu: 0.0.40
codegen_flags: <defaults>
</compile_context>

<pallas_src>
import math
import functools

import jax
import jax.numpy as jnp
from jax import lax
from jax.experimental import pallas as pl
from jax.experimental.pallas import tpu as pltpu


def _round_up(x, m):
    return ((x + m - 1) // m) * m


def _gelu_exact(x):
    # PyTorch nn.GELU() default = exact erf-based GELU.
    return 0.5 * x * (1.0 + lax.erf(x * (1.0 / math.sqrt(2.0))))


def _layernorm(x, gamma, beta, eps=1e-5):
    mean = jnp.mean(x, axis=-1, keepdims=True)
    var = jnp.mean((x - mean) ** 2, axis=-1, keepdims=True)
    return (x - mean) * lax.rsqrt(var + eps) * gamma + beta


def dec_layer_kernel(
    hv_ref, he_ref, ma_ref, mv_ref,
    w1v_ref, w1e_ref, b1_ref,
    w2_ref, b2_ref,
    w3_ref, b3_ref,
    g1_ref, be1_ref,
    win_ref, bin_ref,
    wout_ref, bout_ref,
    g2_ref, be2_ref,
    out_ref,
    *, num_k, hin, scale,
):
    f32 = jnp.float32
    mm_dtype = w1v_ref.dtype            # MXU operand dtype (bf16 by default, or f32)

    hv_in = hv_ref[...]                 # (TM, H)  mm_dtype
    hv = hv_in.astype(f32)
    he = he_ref[...]                    # (TM, K*Hin)  mm_dtype
    ma = ma_ref[...].astype(f32)        # (TM, K)

    # --- edge-message MLP: W3(gelu(W2(gelu(W1([h_V, h_E]))))) -----------------
    # W1 is split into the h_V slice and the h_E slice so the concatenated h_EV
    # tensor is never materialized; the h_V part (plus bias) is shared across K.
    hvp = jnp.dot(hv_in, w1v_ref[...], preferred_element_type=f32) + b1_ref[...]   # (TM, H)

    TM, H = hv.shape
    acc = jnp.zeros((TM, H), f32)
    for k in range(num_k):              # static unroll; everything stays 2-D
        he_k = he[:, k * hin:(k + 1) * hin]                                         # (TM, Hin)
        h1 = _gelu_exact(jnp.dot(he_k, w1e_ref[...], preferred_element_type=f32) + hvp)
        h2 = _gelu_exact(
            jnp.dot(h1.astype(mm_dtype), w2_ref[...], preferred_element_type=f32) + b2_ref[...])
        h3 = jnp.dot(h2.astype(mm_dtype), w3_ref[...], preferred_element_type=f32) + b3_ref[...]
        # fuse mask_attend into the neighbor accumulation (no (TM,K,H) temporary)
        acc = acc + h3 * ma[:, k:k + 1]

    dh = acc * (1.0 / scale)

    # --- residual + LayerNorm 1 (dropout = identity in eval) ------------------
    x = _layernorm(hv + dh, g1_ref[...], be1_ref[...])

    # --- PositionWiseFeedForward ----------------------------------------------
    ff = _gelu_exact(
        jnp.dot(x.astype(mm_dtype), win_ref[...], preferred_element_type=f32) + bin_ref[...])
    dh2 = jnp.dot(ff.astype(mm_dtype), wout_ref[...], preferred_element_type=f32) + bout_ref[...]

    # --- residual + LayerNorm 2 + node mask ------------------------------------
    y = _layernorm(x + dh2, g2_ref[...], be2_ref[...])
    y = y * mv_ref[...].astype(f32)

    out_ref[...] = y.astype(out_ref.dtype)


def dec_layer_pallas(h_V, h_E, mask_V=None, mask_attend=None, params=None, *,
                     scale=30.0, tile_m=256, compute_dtype=jnp.bfloat16):
    """h_V: [B,L,H], h_E: [B,L,K,Hin], mask_V: [B,L], mask_attend: [B,L,K]."""
    B, L, H = h_V.shape
    K, Hin = h_E.shape[2], h_E.shape[3]
    N = B * L
    f32 = jnp.float32
    cd = compute_dtype

    if mask_V is None:
        mask_V = jnp.ones((B, L), f32)
    if mask_attend is None:
        mask_attend = jnp.ones((B, L, K), f32)

    # Row tile: multiple of 8 sublanes, no larger than the (padded) row count.
    tile_m = _round_up(max(8, min(int(tile_m), _round_up(N, 8))), 8)
    Np = _round_up(N, tile_m)

    hv = h_V.reshape(N, H).astype(cd)
    he = h_E.reshape(N, K * Hin).astype(cd)          # 2-D lane-dense h_E slab
    ma = mask_attend.reshape(N, K).astype(f32)
    mv = mask_V.reshape(N, 1).astype(f32)

    if Np != N:                                       # pad ragged last tile
        pad = Np - N
        hv = jnp.pad(hv, ((0, pad), (0, 0)))
        he = jnp.pad(he, ((0, pad), (0, 0)))
        ma = jnp.pad(ma, ((0, pad), (0, 0)))
        mv = jnp.pad(mv, ((0, pad), (0, 0)))

    (w1, b1, w2, b2, w3, b3, g1, be1, win, bin_, wout, bout, g2, be2) = params
    # Split W1 ([H+Hin, H]) into the h_V slice and the h_E slice.
    w1v = w1[:H, :].astype(cd)
    w1e = w1[H:, :].astype(cd)
    w2c, w3c = w2.astype(cd), w3.astype(cd)
    winc, woutc = win.astype(cd), wout.astype(cd)
    b1f, b2f, b3f = b1.astype(f32), b2.astype(f32), b3.astype(f32)
    binf, boutf = bin_.astype(f32), bout.astype(f32)
    g1f, be1f, g2f, be2f = g1.astype(f32), be1.astype(f32), g2.astype(f32), be2.astype(f32)

    const2d = lambda shape: pl.BlockSpec(shape, lambda i: (0, 0))
    row2d = lambda w: pl.BlockSpec((tile_m, w), lambda i: (i, 0))

    kernel = functools.partial(dec_layer_kernel, num_k=K, hin=Hin, scale=float(scale))

    out = pl.pallas_call(
        kernel,
        out_shape=jax.ShapeDtypeStruct((Np, H), jnp.float32),
        grid_spec=pltpu.PrefetchScalarGridSpec(
            num_scalar_prefetch=0,
            grid=(Np // tile_m,),
            in_specs=[
                row2d(H),              # h_V tile
                row2d(K * Hin),        # h_E tile (flattened over K)
                row2d(K),              # mask_attend tile
                row2d(1),              # mask_V tile
                const2d((H, H)),       # W1_v
                const2d((Hin, H)),     # W1_e
                const2d((1, H)),       # b1
                const2d((H, H)),       # W2
                const2d((1, H)),       # b2
                const2d((H, H)),       # W3
                const2d((1, H)),       # b3
                const2d((1, H)),       # ln1 gamma
                const2d((1, H)),       # ln1 beta
                const2d((H, 4 * H)),   # FFN W_in
                const2d((1, 4 * H)),   # FFN b_in
                const2d((4 * H, H)),   # FFN W_out
                const2d((1, H)),       # FFN b_out
                const2d((1, H)),       # ln2 gamma
                const2d((1, H)),       # ln2 beta
            ],
            out_specs=pl.BlockSpec((tile_m, H), lambda i: (i, 0)),
        ),
        compiler_params=pltpu.CompilerParams(
            dimension_semantics=("parallel",),
            vmem_limit_bytes=48 * 1024 * 1024,
        ),
    )(hv, he, ma, mv,
      w1v, w1e, b1f, w2c, b2f, w3c, b3f,
      g1f, be1f, winc, binf, woutc, boutf, g2f, be2f)

    return out[:N].reshape(B, L, H)


def dec_layer_reference(h_V, h_E, mask_V, mask_attend, params, *, scale=30.0, cast_dtype=None):
    """Pure-JAX mirror of the PyTorch forward (eval mode).

    cast_dtype=None       -> exact f32 reference of the original module.
    cast_dtype=bfloat16   -> mirrors the kernel's bf16 MXU-operand quantization
                             (all accumulation / elementwise math stays f32).
    """
    (w1, b1, w2, b2, w3, b3, g1, be1, win, bin_, wout, bout, g2, be2) = params
    hp = lax.Precision.HIGHEST

    def q(x):
        if cast_dtype is None:
            return x.astype(jnp.float32)
        return x.astype(cast_dtype).astype(jnp.float32)

    h_Vq, h_Eq = q(h_V), q(h_E)
    w1q, w2q, w3q, winq, woutq = q(w1), q(w2), q(w3), q(win), q(wout)

    K = h_E.shape[-2]
    h_V_expand = jnp.broadcast_to(h_Vq[..., None, :], h_Vq.shape[:-1] + (K, h_Vq.shape[-1]))
    h_EV = jnp.concatenate([h_V_expand, h_Eq], axis=-1)
    h = _gelu_exact(jnp.matmul(h_EV, w1q, precision=hp) + b1[0])
    h = _gelu_exact(jnp.matmul(q(h), w2q, precision=hp) + b2[0])
    h_message = jnp.matmul(q(h), w3q, precision=hp) + b3[0]
    h_message = mask_attend[..., None] * h_message
    dh = jnp.sum(h_message, axis=-2) / scale
    x = _layernorm(h_Vq + dh, g1[0], be1[0])
    ff = _gelu_exact(jnp.matmul(q(x), winq, precision=hp) + bin_[0])
    dh2 = jnp.matmul(q(ff), woutq, precision=hp) + bout[0]
    y = _layernorm(x + dh2, g2[0], be2[0])
    return mask_V[..., None] * y


def init_params(key, H, Hin):
    ks = jax.random.split(key, 10)
    s = 0.1
    w1 = jax.random.normal(ks[0], (H + Hin, H), jnp.float32) * s
    b1 = jax.random.normal(ks[1], (1, H), jnp.float32) * s
    w2 = jax.random.normal(ks[2], (H, H), jnp.float32) * s
    b2 = jax.random.normal(ks[3], (1, H), jnp.float32) * s
    w3 = jax.random.normal(ks[4], (H, H), jnp.float32) * s
    b3 = jax.random.normal(ks[5], (1, H), jnp.float32) * s
    g1 = jnp.ones((1, H), jnp.float32)
    be1 = jnp.zeros((1, H), jnp.float32)
    win = jax.random.normal(ks[6], (H, 4 * H), jnp.float32) * s
    bin_ = jax.random.normal(ks[7], (1, 4 * H), jnp.float32) * s
    wout = jax.random.normal(ks[8], (4 * H, H), jnp.float32) * s
    bout = jax.random.normal(ks[9], (1, H), jnp.float32) * s
    g2 = jnp.ones((1, H), jnp.float32)
    be2 = jnp.zeros((1, H), jnp.float32)
    return (w1, b1, w2, b2, w3, b3, g1, be1, win, bin_, wout, bout, g2, be2)


if __name__ == "__main__":
    # Small shapes consistent with the module: num_hidden=32, num_in=64,
    # batch=2, seq(nodes)=8, K(neighbors)=4.
    B, L, K, H, Hin = 2, 8, 4, 32, 64
    key = jax.random.PRNGKey(0)
    k1, k2, k3, k4, kp = jax.random.split(key, 5)

    h_V = jax.random.normal(k1, (B, L, H), jnp.float32)
    h_E = jax.random.normal(k2, (B, L, K, Hin), jnp.float32)
    mask_V = (jax.random.uniform(k3, (B, L)) > 0.2).astype(jnp.float32)
    mask_attend = (jax.random.uniform(k4, (B, L, K)) > 0.2).astype(jnp.float32)

    params = init_params(kp, H, Hin)

    out = dec_layer_pallas(h_V, h_E, mask_V, mask_attend, params,
                           scale=30.0, tile_m=256, compute_dtype=jnp.bfloat16)
    out = jax.block_until_ready(out)
    assert out.shape == (B, L, H)

    # Tight check vs. a reference that mirrors the kernel's bf16 operand casts.
    ref_q = dec_layer_reference(h_V, h_E, mask_V, mask_attend, params,
                                scale=30.0, cast_dtype=jnp.bfloat16)
    err_q = float(jnp.max(jnp.abs(out - ref_q)))
    assert jnp.allclose(out, ref_q, atol=1e-3, rtol=1e-3), err_q

    # Loose sanity check vs. the exact f32 forward of the original module.
    ref_f = dec_layer_reference(h_V, h_E, mask_V, mask_attend, params,
                                scale=30.0, cast_dtype=None)
    err_f = float(jnp.max(jnp.abs(out - ref_f)))
    assert err_f < 1e-1, err_f

    print("KERNEL_OK")
</pallas_src>

<mosaic_0001>
module attributes {stable_mosaic.version = 11 : i64} {
  func.func @dec_layer_kernel(%arg0: i32, %arg1: memref<16x32xbf16, #tpu.memory_space<vmem>>, %arg2: memref<16x256xbf16, #tpu.memory_space<vmem>>, %arg3: memref<16x4xf32, #tpu.memory_space<vmem>>, %arg4: memref<16x1xf32, #tpu.memory_space<vmem>>, %arg5: memref<32x32xbf16, #tpu.memory_space<vmem>>, %arg6: memref<64x32xbf16, #tpu.memory_space<vmem>>, %arg7: memref<1x32xf32, #tpu.memory_space<vmem>>, %arg8: memref<32x32xbf16, #tpu.memory_space<vmem>>, %arg9: memref<1x32xf32, #tpu.memory_space<vmem>>, %arg10: memref<32x32xbf16, #tpu.memory_space<vmem>>, %arg11: memref<1x32xf32, #tpu.memory_space<vmem>>, %arg12: memref<1x32xf32, #tpu.memory_space<vmem>>, %arg13: memref<1x32xf32, #tpu.memory_space<vmem>>, %arg14: memref<32x128xbf16, #tpu.memory_space<vmem>>, %arg15: memref<1x128xf32, #tpu.memory_space<vmem>>, %arg16: memref<128x32xbf16, #tpu.memory_space<vmem>>, %arg17: memref<1x32xf32, #tpu.memory_space<vmem>>, %arg18: memref<1x32xf32, #tpu.memory_space<vmem>>, %arg19: memref<1x32xf32, #tpu.memory_space<vmem>>, %arg20: memref<16x32xf32, #tpu.memory_space<vmem>>) attributes {dimension_semantics = [#tpu.dimension_semantics<parallel>], iteration_bounds = array<i64: 1>, scalar_prefetch = 0 : i64, scratch_operands = 0 : i64, tpu.core_type = #tpu.core_type<tc>, window_params = [{transform_indices = @transform_0, window_bounds = array<i64: 16, 32>}, {transform_indices = @transform_1, window_bounds = array<i64: 16, 256>}, {transform_indices = @transform_2, window_bounds = array<i64: 16, 4>}, {transform_indices = @transform_3, window_bounds = array<i64: 16, 1>}, {pipeline_mode = #tpu.pipeline_mode<synchronous>, transform_indices = @transform_4, window_bounds = array<i64: 32, 32>}, {pipeline_mode = #tpu.pipeline_mode<synchronous>, transform_indices = @transform_5, window_bounds = array<i64: 64, 32>}, {pipeline_mode = #tpu.pipeline_mode<synchronous>, transform_indices = @transform_6, window_bounds = array<i64: 1, 32>}, {pipeline_mode = #tpu.pipeline_mode<synchronous>, transform_indices = @transform_7, window_bounds = array<i64: 32, 32>}, {pipeline_mode = #tpu.pipeline_mode<synchronous>, transform_indices = @transform_8, window_bounds = array<i64: 1, 32>}, {pipeline_mode = #tpu.pipeline_mode<synchronous>, transform_indices = @transform_9, window_bounds = array<i64: 32, 32>}, {pipeline_mode = #tpu.pipeline_mode<synchronous>, transform_indices = @transform_10, window_bounds = array<i64: 1, 32>}, {pipeline_mode = #tpu.pipeline_mode<synchronous>, transform_indices = @transform_11, window_bounds = array<i64: 1, 32>}, {pipeline_mode = #tpu.pipeline_mode<synchronous>, transform_indices = @transform_12, window_bounds = array<i64: 1, 32>}, {pipeline_mode = #tpu.pipeline_mode<synchronous>, transform_indices = @transform_13, window_bounds = array<i64: 32, 128>}, {pipeline_mode = #tpu.pipeline_mode<synchronous>, transform_indices = @transform_14, window_bounds = array<i64: 1, 128>}, {pipeline_mode = #tpu.pipeline_mode<synchronous>, transform_indices = @transform_15, window_bounds = array<i64: 128, 32>}, {pipeline_mode = #tpu.pipeline_mode<synchronous>, transform_indices = @transform_16, window_bounds = array<i64: 1, 32>}, {pipeline_mode = #tpu.pipeline_mode<synchronous>, transform_indices = @transform_17, window_bounds = array<i64: 1, 32>}, {pipeline_mode = #tpu.pipeline_mode<synchronous>, transform_indices = @transform_18, window_bounds = array<i64: 1, 32>}, {transform_indices = @transform_19, window_bounds = array<i64: 16, 32>}]} {
    %c0 = arith.constant 0 : index
    %c0_0 = arith.constant 0 : index
    %0 = vector.load %arg1[%c0, %c0_0] : memref<16x32xbf16, #tpu.memory_space<vmem>>, vector<16x32xbf16>
    %1 = arith.extf %0 : vector<16x32xbf16> to vector<16x32xf32>
    %c0_1 = arith.constant 0 : index
    %c0_2 = arith.constant 0 : index
    %2 = vector.load %arg2[%c0_1, %c0_2] : memref<16x256xbf16, #tpu.memory_space<vmem>>, vector<16x256xbf16>
    %c0_3 = arith.constant 0 : index
    %c0_4 = arith.constant 0 : index
    %3 = vector.load %arg3[%c0_3, %c0_4] : memref<16x4xf32, #tpu.memory_space<vmem>>, vector<16x4xf32>
    %c0_5 = arith.constant 0 : index
    %c0_6 = arith.constant 0 : index
    %4 = vector.load %arg5[%c0_5, %c0_6] : memref<32x32xbf16, #tpu.memory_space<vmem>>, vector<32x32xbf16>
    %cst = arith.constant dense<0.000000e+00> : vector<16x32xf32>
    %5 = tpu.matmul %0, %4, %cst {dimension_numbers = #tpu.dot_dimension_numbers<[1], [0], [0], [1], [0, 0, 1, 1], [], []>} : vector<16x32xbf16>, vector<32x32xbf16>, vector<16x32xf32> -> vector<16x32xf32>
    %c0_7 = arith.constant 0 : index
    %c0_8 = arith.constant 0 : index
    %6 = vector.load %arg7[%c0_7, %c0_8] : memref<1x32xf32, #tpu.memory_space<vmem>>, vector<1x32xf32>
    %7 = vector.broadcast %6 : vector<1x32xf32> to vector<16x32xf32>
    %8 = arith.addf %5, %7 : vector<16x32xf32>
    %cst_9 = arith.constant 0.000000e+00 : f32
    %9 = vector.broadcast %cst_9 : f32 to vector<16x32xf32>
    %10 = vector.extract_strided_slice %2 {offsets = [0, 0], sizes = [16, 64], strides = [1, 1]} : vector<16x256xbf16> to vector<16x64xbf16>
    %c0_10 = arith.constant 0 : index
    %c0_11 = arith.constant 0 : index
    %11 = vector.load %arg6[%c0_10, %c0_11] : memref<64x32xbf16, #tpu.memory_space<vmem>>, vector<64x32xbf16>
    %cst_12 = arith.constant dense<0.000000e+00> : vector<16x32xf32>
    %12 = tpu.matmul %10, %11, %cst_12 {dimension_numbers = #tpu.dot_dimension_numbers<[1], [0], [0], [1], [0, 0, 1, 1], [], []>} : vector<16x64xbf16>, vector<64x32xbf16>, vector<16x32xf32> -> vector<16x32xf32>
    %13 = arith.addf %12, %8 : vector<16x32xf32>
    %cst_13 = arith.constant 5.000000e-01 : f32
    %14 = vector.broadcast %cst_13 : f32 to vector<16x32xf32>
    %15 = arith.mulf %14, %13 : vector<16x32xf32>
    %cst_14 = arith.constant 0.707106769 : f32
    %16 = vector.broadcast %cst_14 : f32 to vector<16x32xf32>
    %17 = arith.mulf %13, %16 : vector<16x32xf32>
    %18 = math.erf %17 : vector<16x32xf32>
    %cst_15 = arith.constant 1.000000e+00 : f32
    %19 = vector.broadcast %cst_15 : f32 to vector<16x32xf32>
    %20 = arith.addf %19, %18 : vector<16x32xf32>
    %21 = arith.mulf %15, %20 : vector<16x32xf32>
    %22 = arith.truncf %21 : vector<16x32xf32> to vector<16x32xbf16>
    %c0_16 = arith.constant 0 : index
    %c0_17 = arith.constant 0 : index
    %23 = vector.load %arg8[%c0_16, %c0_17] : memref<32x32xbf16, #tpu.memory_space<vmem>>, vector<32x32xbf16>
    %cst_18 = arith.constant dense<0.000000e+00> : vector<16x32xf32>
    %24 = tpu.matmul %22, %23, %cst_18 {dimension_numbers = #tpu.dot_dimension_numbers<[1], [0], [0], [1], [0, 0, 1, 1], [], []>} : vector<16x32xbf16>, vector<32x32xbf16>, vector<16x32xf32> -> vector<16x32xf32>
    %c0_19 = arith.constant 0 : index
    %c0_20 = arith.constant 0 : index
    %25 = vector.load %arg9[%c0_19, %c0_20] : memref<1x32xf32, #tpu.memory_space<vmem>>, vector<1x32xf32>
    %26 = vector.broadcast %25 : vector<1x32xf32> to vector<16x32xf32>
    %27 = arith.addf %24, %26 : vector<16x32xf32>
    %cst_21 = arith.constant 5.000000e-01 : f32
    %28 = vector.broadcast %cst_21 : f32 to vector<16x32xf32>
    %29 = arith.mulf %28, %27 : vector<16x32xf32>
    %cst_22 = arith.constant 0.707106769 : f32
    %30 = vector.broadcast %cst_22 : f32 to vector<16x32xf32>
    %31 = arith.mulf %27, %30 : vector<16x32xf32>
    %32 = math.erf %31 : vector<16x32xf32>
    %cst_23 = arith.constant 1.000000e+00 : f32
    %33 = vector.broadcast %cst_23 : f32 to vector<16x32xf32>
    %34 = arith.addf %33, %32 : vector<16x32xf32>
    %35 = arith.mulf %29, %34 : vector<16x32xf32>
    %36 = arith.truncf %35 : vector<16x32xf32> to vector<16x32xbf16>
    %c0_24 = arith.constant 0 : index
    %c0_25 = arith.constant 0 : index
    %37 = vector.load %arg10[%c0_24, %c0_25] : memref<32x32xbf16, #tpu.memory_space<vmem>>, vector<32x32xbf16>
    %cst_26 = arith.constant dense<0.000000e+00> : vector<16x32xf32>
    %38 = tpu.matmul %36, %37, %cst_26 {dimension_numbers = #tpu.dot_dimension_numbers<[1], [0], [0], [1], [0, 0, 1, 1], [], []>} : vector<16x32xbf16>, vector<32x32xbf16>, vector<16x32xf32> -> vector<16x32xf32>
    %c0_27 = arith.constant 0 : index
    %c0_28 = arith.constant 0 : index
    %39 = vector.load %arg11[%c0_27, %c0_28] : memref<1x32xf32, #tpu.memory_space<vmem>>, vector<1x32xf32>
    %40 = vector.broadcast %39 : vector<1x32xf32> to vector<16x32xf32>
    %41 = arith.addf %38, %40 : vector<16x32xf32>
    %42 = vector.extract_strided_slice %3 {offsets = [0, 0], sizes = [16, 1], strides = [1, 1]} : vector<16x4xf32> to vector<16x1xf32>
    %43 = vector.broadcast %42 : vector<16x1xf32> to vector<16x32xf32>
    %44 = arith.mulf %41, %43 : vector<16x32xf32>
    %45 = arith.addf %9, %44 : vector<16x32xf32>
    %46 = vector.extract_strided_slice %2 {offsets = [0, 64], sizes = [16, 64], strides = [1, 1]} : vector<16x256xbf16> to vector<16x64xbf16>
    %c0_29 = arith.constant 0 : index
    %c0_30 = arith.constant 0 : index
    %47 = vector.load %arg6[%c0_29, %c0_30] : memref<64x32xbf16, #tpu.memory_space<vmem>>, vector<64x32xbf16>
    %cst_31 = arith.constant dense<0.000000e+00> : vector<16x32xf32>
    %48 = tpu.matmul %46, %47, %cst_31 {dimension_numbers = #tpu.dot_dimension_numbers<[1], [0], [0], [1], [0, 0, 1, 1], [], []>} : vector<16x64xbf16>, vector<64x32xbf16>, vector<16x32xf32> -> vector<16x32xf32>
    %49 = arith.addf %48, %8 : vector<16x32xf32>
    %cst_32 = arith.constant 5.000000e-01 : f32
    %50 = vector.broadcast %cst_32 : f32 to vector<16x32xf32>
    %51 = arith.mulf %50, %49 : vector<16x32xf32>
    %cst_33 = arith.constant 0.707106769 : f32
    %52 = vector.broadcast %cst_33 : f32 to vector<16x32xf32>
    %53 = arith.mulf %49, %52 : vector<16x32xf32>
    %54 = math.erf %53 : vector<16x32xf32>
    %cst_34 = arith.constant 1.000000e+00 : f32
    %55 = vector.broadcast %cst_34 : f32 to vector<16x32xf32>
    %56 = arith.addf %55, %54 : vector<16x32xf32>
    %57 = arith.mulf %51, %56 : vector<16x32xf32>
    %58 = arith.truncf %57 : vector<16x32xf32> to vector<16x32xbf16>
    %c0_35 = arith.constant 0 : index
    %c0_36 = arith.constant 0 : index
    %59 = vector.load %arg8[%c0_35, %c0_36] : memref<32x32xbf16, #tpu.memory_space<vmem>>, vector<32x32xbf16>
    %cst_37 = arith.constant dense<0.000000e+00> : vector<16x32xf32>
    %60 = tpu.matmul %58, %59, %cst_37 {dimension_numbers = #tpu.dot_dimension_numbers<[1], [0], [0], [1], [0, 0, 1, 1], [], []>} : vector<16x32xbf16>, vector<32x32xbf16>, vector<16x32xf32> -> vector<16x32xf32>
    %c0_38 = arith.constant 0 : index
    %c0_39 = arith.constant 0 : index
    %61 = vector.load %arg9[%c0_38, %c0_39] : memref<1x32xf32, #tpu.memory_space<vmem>>, vector<1x32xf32>
    %62 = vector.broadcast %61 : vector<1x32xf32> to vector<16x32xf32>
    %63 = arith.addf %60, %62 : vector<16x32xf32>
    %cst_40 = arith.constant 5.000000e-01 : f32
    %64 = vector.broadcast %cst_40 : f32 to vector<16x32xf32>
    %65 = arith.mulf %64, %63 : vector<16x32xf32>
    %cst_41 = arith.constant 0.707106769 : f32
    %66 = vector.broadcast %cst_41 : f32 to vector<16x32xf32>
    %67 = arith.mulf %63, %66 : vector<16x32xf32>
    %68 = math.erf %67 : vector<16x32xf32>
    %cst_42 = arith.constant 1.000000e+00 : f32
    %69 = vector.broadcast %cst_42 : f32 to vector<16x32xf32>
    %70 = arith.addf %69, %68 : vector<16x32xf32>
    %71 = arith.mulf %65, %70 : vector<16x32xf32>
    %72 = arith.truncf %71 : vector<16x32xf32> to vector<16x32xbf16>
    %c0_43 = arith.constant 0 : index
    %c0_44 = arith.constant 0 : index
    %73 = vector.load %arg10[%c0_43, %c0_44] : memref<32x32xbf16, #tpu.memory_space<vmem>>, vector<32x32xbf16>
    %cst_45 = arith.constant dense<0.000000e+00> : vector<16x32xf32>
    %74 = tpu.matmul %72, %73, %cst_45 {dimension_numbers = #tpu.dot_dimension_numbers<[1], [0], [0], [1], [0, 0, 1, 1], [], []>} : vector<16x32xbf16>, vector<32x32xbf16>, vector<16x32xf32> -> vector<16x32xf32>
    %c0_46 = arith.constant 0 : index
    %c0_47 = arith.constant 0 : index
    %75 = vector.load %arg11[%c0_46, %c0_47] : memref<1x32xf32, #tpu.memory_space<vmem>>, vector<1x32xf32>
    %76 = vector.broadcast %75 : vector<1x32xf32> to vector<16x32xf32>
    %77 = arith.addf %74, %76 : vector<16x32xf32>
    %78 = vector.extract_strided_slice %3 {offsets = [0, 1], sizes = [16, 1], strides = [1, 1]} : vector<16x4xf32> to vector<16x1xf32>
    %79 = vector.broadcast %78 : vector<16x1xf32> to vector<16x32xf32>
    %80 = arith.mulf %77, %79 : vector<16x32xf32>
    %81 = arith.addf %45, %80 : vector<16x32xf32>
    %82 = vector.extract_strided_slice %2 {offsets = [0, 128], sizes = [16, 64], strides = [1, 1]} : vector<16x256xbf16> to vector<16x64xbf16>
    %c0_48 = arith.constant 0 : index
    %c0_49 = arith.constant 0 : index
    %83 = vector.load %arg6[%c0_48, %c0_49] : memref<64x32xbf16, #tpu.memory_space<vmem>>, vector<64x32xbf16>
    %cst_50 = arith.constant dense<0.000000e+00> : vector<16x32xf32>
    %84 = tpu.matmul %82, %83, %cst_50 {dimension_numbers = #tpu.dot_dimension_numbers<[1], [0], [0], [1], [0, 0, 1, 1], [], []>} : vector<16x64xbf16>, vector<64x32xbf16>, vector<16x32xf32> -> vector<16x32xf32>
    %85 = arith.addf %84, %8 : vector<16x32xf32>
    %cst_51 = arith.constant 5.000000e-01 : f32
    %86 = vector.broadcast %cst_51 : f32 to vector<16x32xf32>
    %87 = arith.mulf %86, %85 : vector<16x32xf32>
    %cst_52 = arith.constant 0.707106769 : f32
    %88 = vector.broadcast %cst_52 : f32 to vector<16x32xf32>
    %89 = arith.mulf %85, %88 : vector<16x32xf32>
    %90 = math.erf %89 : vector<16x32xf32>
    %cst_53 = arith.constant 1.000000e+00 : f32
    %91 = vector.broadcast %cst_53 : f32 to vector<16x32xf32>
    %92 = arith.addf %91, %90 : vector<16x32xf32>
    %93 = arith.mulf %87, %92 : vector<16x32xf32>
    %94 = arith.truncf %93 : vector<16x32xf32> to vector<16x32xbf16>
    %c0_54 = arith.constant 0 : index
    %c0_55 = arith.constant 0 : index
    %95 = vector.load %arg8[%c0_54, %c0_55] : memref<32x32xbf16, #tpu.memory_space<vmem>>, vector<32x32xbf16>
    %cst_56 = arith.constant dense<0.000000e+00> : vector<16x32xf32>
    %96 = tpu.matmul %94, %95, %cst_56 {dimension_numbers = #tpu.dot_dimension_numbers<[1], [0], [0], [1], [0, 0, 1, 1], [], []>} : vector<16x32xbf16>, vector<32x32xbf16>, vector<16x32xf32> -> vector<16x32xf32>
    %c0_57 = arith.constant 0 : index
    %c0_58 = arith.constant 0 : index
    %97 = vector.load %arg9[%c0_57, %c0_58] : memref<1x32xf32, #tpu.memory_space<vmem>>, vector<1x32xf32>
    %98 = vector.broadcast %97 : vector<1x32xf32> to vector<16x32xf32>
    %99 = arith.addf %96, %98 : vector<16x32xf32>
    %cst_59 = arith.constant 5.000000e-01 : f32
    %100 = vector.broadcast %cst_59 : f32 to vector<16x32xf32>
    %101 = arith.mulf %100, %99 : vector<16x32xf32>
    %cst_60 = arith.constant 0.707106769 : f32
    %102 = vector.broadcast %cst_60 : f32 to vector<16x32xf32>
    %103 = arith.mulf %99, %102 : vector<16x32xf32>
    %104 = math.erf %103 : vector<16x32xf32>
    %cst_61 = arith.constant 1.000000e+00 : f32
    %105 = vector.broadcast %cst_61 : f32 to vector<16x32xf32>
    %106 = arith.addf %105, %104 : vector<16x32xf32>
    %107 = arith.mulf %101, %106 : vector<16x32xf32>
    %108 = arith.truncf %107 : vector<16x32xf32> to vector<16x32xbf16>
    %c0_62 = arith.constant 0 : index
    %c0_63 = arith.constant 0 : index
    %109 = vector.load %arg10[%c0_62, %c0_63] : memref<32x32xbf16, #tpu.memory_space<vmem>>, vector<32x32xbf16>
    %cst_64 = arith.constant dense<0.000000e+00> : vector<16x32xf32>
    %110 = tpu.matmul %108, %109, %cst_64 {dimension_numbers = #tpu.dot_dimension_numbers<[1], [0], [0], [1], [0, 0, 1, 1], [], []>} : vector<16x32xbf16>, vector<32x32xbf16>, vector<16x32xf32> -> vector<16x32xf32>
    %c0_65 = arith.constant 0 : index
    %c0_66 = arith.constant 0 : index
    %111 = vector.load %arg11[%c0_65, %c0_66] : memref<1x32xf32, #tpu.memory_space<vmem>>, vector<1x32xf32>
    %112 = vector.broadcast %111 : vector<1x32xf32> to vector<16x32xf32>
    %113 = arith.addf %110, %112 : vector<16x32xf32>
    %114 = vector.extract_strided_slice %3 {offsets = [0, 2], sizes = [16, 1], strides = [1, 1]} : vector<16x4xf32> to vector<16x1xf32>
    %115 = vector.broadcast %114 : vector<16x1xf32> to vector<16x32xf32>
    %116 = arith.mulf %113, %115 : vector<16x32xf32>
    %117 = arith.addf %81, %116 : vector<16x32xf32>
    %118 = vector.extract_strided_slice %2 {offsets = [0, 192], sizes = [16, 64], strides = [1, 1]} : vector<16x256xbf16> to vector<16x64xbf16>
    %c0_67 = arith.constant 0 : index
    %c0_68 = arith.constant 0 : index
    %119 = vector.load %arg6[%c0_67, %c0_68] : memref<64x32xbf16, #tpu.memory_space<vmem>>, vector<64x32xbf16>
    %cst_69 = arith.constant dense<0.000000e+00> : vector<16x32xf32>
    %120 = tpu.matmul %118, %119, %cst_69 {dimension_numbers = #tpu.dot_dimension_numbers<[1], [0], [0], [1], [0, 0, 1, 1], [], []>} : vector<16x64xbf16>, vector<64x32xbf16>, vector<16x32xf32> -> vector<16x32xf32>
    %121 = arith.addf %120, %8 : vector<16x32xf32>
    %cst_70 = arith.constant 5.000000e-01 : f32
    %122 = vector.broadcast %cst_70 : f32 to vector<16x32xf32>
    %123 = arith.mulf %122, %121 : vector<16x32xf32>
    %cst_71 = arith.constant 0.707106769 : f32
    %124 = vector.broadcast %cst_71 : f32 to vector<16x32xf32>
    %125 = arith.mulf %121, %124 : vector<16x32xf32>
    %126 = math.erf %125 : vector<16x32xf32>
    %cst_72 = arith.constant 1.000000e+00 : f32
    %127 = vector.broadcast %cst_72 : f32 to vector<16x32xf32>
    %128 = arith.addf %127, %126 : vector<16x32xf32>
    %129 = arith.mulf %123, %128 : vector<16x32xf32>
    %130 = arith.truncf %129 : vector<16x32xf32> to vector<16x32xbf16>
    %c0_73 = arith.constant 0 : index
    %c0_74 = arith.constant 0 : index
    %131 = vector.load %arg8[%c0_73, %c0_74] : memref<32x32xbf16, #tpu.memory_space<vmem>>, vector<32x32xbf16>
    %cst_75 = arith.constant dense<0.000000e+00> : vector<16x32xf32>
    %132 = tpu.matmul %130, %131, %cst_75 {dimension_numbers = #tpu.dot_dimension_numbers<[1], [0], [0], [1], [0, 0, 1, 1], [], []>} : vector<16x32xbf16>, vector<32x32xbf16>, vector<16x32xf32> -> vector<16x32xf32>
    %c0_76 = arith.constant 0 : index
    %c0_77 = arith.constant 0 : index
    %133 = vector.load %arg9[%c0_76, %c0_77] : memref<1x32xf32, #tpu.memory_space<vmem>>, vector<1x32xf32>
    %134 = vector.broadcast %133 : vector<1x32xf32> to vector<16x32xf32>
    %135 = arith.addf %132, %134 : vector<16x32xf32>
    %cst_78 = arith.constant 5.000000e-01 : f32
    %136 = vector.broadcast %cst_78 : f32 to vector<16x32xf32>
    %137 = arith.mulf %136, %135 : vector<16x32xf32>
    %cst_79 = arith.constant 0.707106769 : f32
    %138 = vector.broadcast %cst_79 : f32 to vector<16x32xf32>
    %139 = arith.mulf %135, %138 : vector<16x32xf32>
    %140 = math.erf %139 : vector<16x32xf32>
    %cst_80 = arith.constant 1.000000e+00 : f32
    %141 = vector.broadcast %cst_80 : f32 to vector<16x32xf32>
    %142 = arith.addf %141, %140 : vector<16x32xf32>
    %143 = arith.mulf %137, %142 : vector<16x32xf32>
    %144 = arith.truncf %143 : vector<16x32xf32> to vector<16x32xbf16>
    %c0_81 = arith.constant 0 : index
    %c0_82 = arith.constant 0 : index
    %145 = vector.load %arg10[%c0_81, %c0_82] : memref<32x32xbf16, #tpu.memory_space<vmem>>, vector<32x32xbf16>
    %cst_83 = arith.constant dense<0.000000e+00> : vector<16x32xf32>
    %146 = tpu.matmul %144, %145, %cst_83 {dimension_numbers = #tpu.dot_dimension_numbers<[1], [0], [0], [1], [0, 0, 1, 1], [], []>} : vector<16x32xbf16>, vector<32x32xbf16>, vector<16x32xf32> -> vector<16x32xf32>
    %c0_84 = arith.constant 0 : index
    %c0_85 = arith.constant 0 : index
    %147 = vector.load %arg11[%c0_84, %c0_85] : memref<1x32xf32, #tpu.memory_space<vmem>>, vector<1x32xf32>
    %148 = vector.broadcast %147 : vector<1x32xf32> to vector<16x32xf32>
    %149 = arith.addf %146, %148 : vector<16x32xf32>
    %150 = vector.extract_strided_slice %3 {offsets = [0, 3], sizes = [16, 1], strides = [1, 1]} : vector<16x4xf32> to vector<16x1xf32>
    %151 = vector.broadcast %150 : vector<16x1xf32> to vector<16x32xf32>
    %152 = arith.mulf %149, %151 : vector<16x32xf32>
    %153 = arith.addf %117, %152 : vector<16x32xf32>
    %cst_86 = arith.constant 0.0333333351 : f32
    %154 = vector.broadcast %cst_86 : f32 to vector<16x32xf32>
    %155 = arith.mulf %153, %154 : vector<16x32xf32>
    %156 = arith.addf %1, %155 : vector<16x32xf32>
    %c0_87 = arith.constant 0 : index
    %c0_88 = arith.constant 0 : index
    %157 = vector.load %arg12[%c0_87, %c0_88] : memref<1x32xf32, #tpu.memory_space<vmem>>, vector<1x32xf32>
    %c0_89 = arith.constant 0 : index
    %c0_90 = arith.constant 0 : index
    %158 = vector.load %arg13[%c0_89, %c0_90] : memref<1x32xf32, #tpu.memory_space<vmem>>, vector<1x32xf32>
    %cst_91 = arith.constant dense<0.000000e+00> : vector<16xf32>
    %159 = vector.multi_reduction <add>, %156, %cst_91 [1] : vector<16x32xf32> to vector<16xf32>
    %160 = vector.shape_cast %159 : vector<16xf32> to vector<16x1xf32>
    %cst_92 = arith.constant 3.200000e+01 : f32
    %161 = vector.broadcast %cst_92 : f32 to vector<16x1xf32>
    %162 = arith.divf %160, %161 : vector<16x1xf32>
    %163 = vector.broadcast %162 : vector<16x1xf32> to vector<16x32xf32>
    %164 = arith.subf %156, %163 : vector<16x32xf32>
    %165 = arith.mulf %164, %164 : vector<16x32xf32>
    %cst_93 = arith.constant dense<0.000000e+00> : vector<16xf32>
    %166 = vector.multi_reduction <add>, %165, %cst_93 [1] : vector<16x32xf32> to vector<16xf32>
    %167 = vector.shape_cast %166 : vector<16xf32> to vector<16x1xf32>
    %cst_94 = arith.constant 3.200000e+01 : f32
    %168 = vector.broadcast %cst_94 : f32 to vector<16x1xf32>
    %169 = arith.divf %167, %168 : vector<16x1xf32>
    %170 = vector.broadcast %162 : vector<16x1xf32> to vector<16x32xf32>
    %171 = arith.subf %156, %170 : vector<16x32xf32>
    %cst_95 = arith.constant 9.99999974E-6 : f32
    %172 = vector.broadcast %cst_95 : f32 to vector<16x1xf32>
    %173 = arith.addf %169, %172 : vector<16x1xf32>
    %174 = math.rsqrt %173 : vector<16x1xf32>
    %175 = vector.broadcast %174 : vector<16x1xf32> to vector<16x32xf32>
    %176 = arith.mulf %171, %175 : vector<16x32xf32>
    %177 = vector.broadcast %157 : vector<1x32xf32> to vector<16x32xf32>
    %178 = arith.mulf %176, %177 : vector<16x32xf32>
    %179 = vector.broadcast %158 : vector<1x32xf32> to vector<16x32xf32>
    %180 = arith.addf %178, %179 : vector<16x32xf32>
    %181 = arith.truncf %180 : vector<16x32xf32> to vector<16x32xbf16>
    %c0_96 = arith.constant 0 : index
    %c0_97 = arith.constant 0 : index
    %182 = vector.load %arg14[%c0_96, %c0_97] : memref<32x128xbf16, #tpu.memory_space<vmem>>, vector<32x128xbf16>
    %cst_98 = arith.constant dense<0.000000e+00> : vector<16x128xf32>
    %183 = tpu.matmul %181, %182, %cst_98 {dimension_numbers = #tpu.dot_dimension_numbers<[1], [0], [0], [1], [0, 0, 1, 1], [], []>} : vector<16x32xbf16>, vector<32x128xbf16>, vector<16x128xf32> -> vector<16x128xf32>
    %c0_99 = arith.constant 0 : index
    %c0_100 = arith.constant 0 : index
    %184 = vector.load %arg15[%c0_99, %c0_100] : memref<1x128xf32, #tpu.memory_space<vmem>>, vector<1x128xf32>
    %185 = vector.broadcast %184 : vector<1x128xf32> to vector<16x128xf32>
    %186 = arith.addf %183, %185 : vector<16x128xf32>
    %cst_101 = arith.constant 5.000000e-01 : f32
    %187 = vector.broadcast %cst_101 : f32 to vector<16x128xf32>
    %188 = arith.mulf %187, %186 : vector<16x128xf32>
    %cst_102 = arith.constant 0.707106769 : f32
    %189 = vector.broadcast %cst_102 : f32 to vector<16x128xf32>
    %190 = arith.mulf %186, %189 : vector<16x128xf32>
    %191 = math.erf %190 : vector<16x128xf32>
    %cst_103 = arith.constant 1.000000e+00 : f32
    %192 = vector.broadcast %cst_103 : f32 to vector<16x128xf32>
    %193 = arith.addf %192, %191 : vector<16x128xf32>
    %194 = arith.mulf %188, %193 : vector<16x128xf32>
    %195 = arith.truncf %194 : vector<16x128xf32> to vector<16x128xbf16>
    %c0_104 = arith.constant 0 : index
    %c0_105 = arith.constant 0 : index
    %196 = vector.load %arg16[%c0_104, %c0_105] : memref<128x32xbf16, #tpu.memory_space<vmem>>, vector<128x32xbf16>
    %cst_106 = arith.constant dense<0.000000e+00> : vector<16x32xf32>
    %197 = tpu.matmul %195, %196, %cst_106 {dimension_numbers = #tpu.dot_dimension_numbers<[1], [0], [0], [1], [0, 0, 1, 1], [], []>} : vector<16x128xbf16>, vector<128x32xbf16>, vector<16x32xf32> -> vector<16x32xf32>
    %c0_107 = arith.constant 0 : index
    %c0_108 = arith.constant 0 : index
    %198 = vector.load %arg17[%c0_107, %c0_108] : memref<1x32xf32, #tpu.memory_space<vmem>>, vector<1x32xf32>
    %199 = vector.broadcast %198 : vector<1x32xf32> to vector<16x32xf32>
    %200 = arith.addf %197, %199 : vector<16x32xf32>
    %201 = arith.addf %180, %200 : vector<16x32xf32>
    %c0_109 = arith.constant 0 : index
    %c0_110 = arith.constant 0 : index
    %202 = vector.load %arg18[%c0_109, %c0_110] : memref<1x32xf32, #tpu.memory_space<vmem>>, vector<1x32xf32>
    %c0_111 = arith.constant 0 : index
    %c0_112 = arith.constant 0 : index
    %203 = vector.load %arg19[%c0_111, %c0_112] : memref<1x32xf32, #tpu.memory_space<vmem>>, vector<1x32xf32>
    %cst_113 = arith.constant dense<0.000000e+00> : vector<16xf32>
    %204 = vector.multi_reduction <add>, %201, %cst_113 [1] : vector<16x32xf32> to vector<16xf32>
    %205 = vector.shape_cast %204 : vector<16xf32> to vector<16x1xf32>
    %cst_114 = arith.constant 3.200000e+01 : f32
    %206 = vector.broadcast %cst_114 : f32 to vector<16x1xf32>
    %207 = arith.divf %205, %206 : vector<16x1xf32>
    %208 = vector.broadcast %207 : vector<16x1xf32> to vector<16x32xf32>
    %209 = arith.subf %201, %208 : vector<16x32xf32>
    %210 = arith.mulf %209, %209 : vector<16x32xf32>
    %cst_115 = arith.constant dense<0.000000e+00> : vector<16xf32>
    %211 = vector.multi_reduction <add>, %210, %cst_115 [1] : vector<16x32xf32> to vector<16xf32>
    %212 = vector.shape_cast %211 : vector<16xf32> to vector<16x1xf32>
    %cst_116 = arith.constant 3.200000e+01 : f32
    %213 = vector.broadcast %cst_116 : f32 to vector<16x1xf32>
    %214 = arith.divf %212, %213 : vector<16x1xf32>
    %215 = vector.broadcast %207 : vector<16x1xf32> to vector<16x32xf32>
    %216 = arith.subf %201, %215 : vector<16x32xf32>
    %cst_117 = arith.constant 9.99999974E-6 : f32
    %217 = vector.broadcast %cst_117 : f32 to vector<16x1xf32>
    %218 = arith.addf %214, %217 : vector<16x1xf32>
    %219 = math.rsqrt %218 : vector<16x1xf32>
    %220 = vector.broadcast %219 : vector<16x1xf32> to vector<16x32xf32>
    %221 = arith.mulf %216, %220 : vector<16x32xf32>
    %222 = vector.broadcast %202 : vector<1x32xf32> to vector<16x32xf32>
    %223 = arith.mulf %221, %222 : vector<16x32xf32>
    %224 = vector.broadcast %203 : vector<1x32xf32> to vector<16x32xf32>
    %225 = arith.addf %223, %224 : vector<16x32xf32>
    %c0_118 = arith.constant 0 : index
    %c0_119 = arith.constant 0 : index
    %226 = vector.load %arg4[%c0_118, %c0_119] : memref<16x1xf32, #tpu.memory_space<vmem>>, vector<16x1xf32>
    %227 = vector.broadcast %226 : vector<16x1xf32> to vector<16x32xf32>
    %228 = arith.mulf %225, %227 : vector<16x32xf32>
    %c0_120 = arith.constant 0 : index
    %c0_121 = arith.constant 0 : index
    %229 = vector.load %arg20[%c0_120, %c0_121] : memref<16x32xf32, #tpu.memory_space<vmem>>, vector<16x32xf32>
    tpu.vector_store %arg20[%c0_120, %c0_121], %228 {strides = array<i32>} : memref<16x32xf32, #tpu.memory_space<vmem>>, vector<16x32xf32>,
    return
  }
  func.func @transform_0(%arg0: i32) -> (i32, i32) {
    %c0_i32 = arith.constant 0 : i32
    %c0_i32_0 = arith.constant 0 : i32
    return %arg0, %c0_i32 : i32, i32
  }
  func.func @transform_1(%arg0: i32) -> (i32, i32) {
    %c0_i32 = arith.constant 0 : i32
    %c0_i32_0 = arith.constant 0 : i32
    return %arg0, %c0_i32 : i32, i32
  }
  func.func @transform_2(%arg0: i32) -> (i32, i32) {
    %c0_i32 = arith.constant 0 : i32
    %c0_i32_0 = arith.constant 0 : i32
    return %arg0, %c0_i32 : i32, i32
  }
  func.func @transform_3(%arg0: i32) -> (i32, i32) {
    %c0_i32 = arith.constant 0 : i32
    %c0_i32_0 = arith.constant 0 : i32
    return %arg0, %c0_i32 : i32, i32
  }
  func.func @transform_4(%arg0: i32) -> (i32, i32) {
    %c0_i32 = arith.constant 0 : i32
    %c0_i32_0 = arith.constant 0 : i32
    %c0_i32_1 = arith.constant 0 : i32
    return %c0_i32, %c0_i32_0 : i32, i32
  }
  func.func @transform_5(%arg0: i32) -> (i32, i32) {
    %c0_i32 = arith.constant 0 : i32
    %c0_i32_0 = arith.constant 0 : i32
    %c0_i32_1 = arith.constant 0 : i32
    return %c0_i32, %c0_i32_0 : i32, i32
  }
  func.func @transform_6(%arg0: i32) -> (i32, i32) {
    %c0_i32 = arith.constant 0 : i32
    %c0_i32_0 = arith.constant 0 : i32
    %c0_i32_1 = arith.constant 0 : i32
    return %c0_i32, %c0_i32_0 : i32, i32
  }
  func.func @transform_7(%arg0: i32) -> (i32, i32) {
    %c0_i32 = arith.constant 0 : i32
    %c0_i32_0 = arith.constant 0 : i32
    %c0_i32_1 = arith.constant 0 : i32
    return %c0_i32, %c0_i32_0 : i32, i32
  }
  func.func @transform_8(%arg0: i32) -> (i32, i32) {
    %c0_i32 = arith.constant 0 : i32
    %c0_i32_0 = arith.constant 0 : i32
    %c0_i32_1 = arith.constant 0 : i32
    return %c0_i32, %c0_i32_0 : i32, i32
  }
  func.func @transform_9(%arg0: i32) -> (i32, i32) {
    %c0_i32 = arith.constant 0 : i32
    %c0_i32_0 = arith.constant 0 : i32
    %c0_i32_1 = arith.constant 0 : i32
    return %c0_i32, %c0_i32_0 : i32, i32
  }
  func.func @transform_10(%arg0: i32) -> (i32, i32) {
    %c0_i32 = arith.constant 0 : i32
    %c0_i32_0 = arith.constant 0 : i32
    %c0_i32_1 = arith.constant 0 : i32
    return %c0_i32, %c0_i32_0 : i32, i32
  }
  func.func @transform_11(%arg0: i32) -> (i32, i32) {
    %c0_i32 = arith.constant 0 : i32
    %c0_i32_0 = arith.constant 0 : i32
    %c0_i32_1 = arith.constant 0 : i32
    return %c0_i32, %c0_i32_0 : i32, i32
  }
  func.func @transform_12(%arg0: i32) -> (i32, i32) {
    %c0_i32 = arith.constant 0 : i32
    %c0_i32_0 = arith.constant 0 : i32
    %c0_i32_1 = arith.constant 0 : i32
    return %c0_i32, %c0_i32_0 : i32, i32
  }
  func.func @transform_13(%arg0: i32) -> (i32, i32) {
    %c0_i32 = arith.constant 0 : i32
    %c0_i32_0 = arith.constant 0 : i32
    %c0_i32_1 = arith.constant 0 : i32
    return %c0_i32, %c0_i32_0 : i32, i32
  }
  func.func @transform_14(%arg0: i32) -> (i32, i32) {
    %c0_i32 = arith.constant 0 : i32
    %c0_i32_0 = arith.constant 0 : i32
    %c0_i32_1 = arith.constant 0 : i32
    return %c0_i32, %c0_i32_0 : i32, i32
  }
  func.func @transform_15(%arg0: i32) -> (i32, i32) {
    %c0_i32 = arith.constant 0 : i32
    %c0_i32_0 = arith.constant 0 : i32
    %c0_i32_1 = arith.constant 0 : i32
    return %c0_i32, %c0_i32_0 : i32, i32
  }
  func.func @transform_16(%arg0: i32) -> (i32, i32) {
    %c0_i32 = arith.constant 0 : i32
    %c0_i32_0 = arith.constant 0 : i32
    %c0_i32_1 = arith.constant 0 : i32
    return %c0_i32, %c0_i32_0 : i32, i32
  }
  func.func @transform_17(%arg0: i32) -> (i32, i32) {
    %c0_i32 = arith.constant 0 : i32
    %c0_i32_0 = arith.constant 0 : i32
    %c0_i32_1 = arith.constant 0 : i32
    return %c0_i32, %c0_i32_0 : i32, i32
  }
  func.func @transform_18(%arg0: i32) -> (i32, i32) {
    %c0_i32 = arith.constant 0 : i32
    %c0_i32_0 = arith.constant 0 : i32
    %c0_i32_1 = arith.constant 0 : i32
    return %c0_i32, %c0_i32_0 : i32, i32
  }
  func.func @transform_19(%arg0: i32) -> (i32, i32) {
    %c0_i32 = arith.constant 0 : i32
    %c0_i32_0 = arith.constant 0 : i32
    return %arg0, %c0_i32 : i32, i32
  }
}

</mosaic_0001>

<llo_original>
// kernel: tpu_custom_call.1
$region0: #{tpu_custom_call.1}
  #allocation0 [shape = 'u32[]', space=smem, size = 0x4, offset = 0x4, fixed_abs, tag = 'smem constant byte address 0x4 - core index']
  #allocation1 [shape = 'u32[144,128]{1,0:T(1,128)}', space=vmem, size = 0x12000, scoped, tag = 'internal scratch']
  %s0 = inlined_call_operand.vmem [shape: bf16[16,32], index: 0, kind: input, shape index: {}]
  %s1 = inlined_call_operand.vmem [shape: bf16[16,256], index: 1, kind: input, shape index: {}]
  %s2 = inlined_call_operand.vmem [shape: f32[16,4], index: 2, kind: input, shape index: {}]
  %s3 = inlined_call_operand.vmem [shape: f32[16,1], index: 3, kind: input, shape index: {}]
  %s4 = inlined_call_operand.vmem [shape: bf16[32,32], index: 4, kind: input, shape index: {}]
  %s5 = inlined_call_operand.vmem [shape: bf16[64,32], index: 5, kind: input, shape index: {}]
  %s6 = inlined_call_operand.vmem [shape: f32[1,32], index: 6, kind: input, shape index: {}]
  %s7 = inlined_call_operand.vmem [shape: bf16[32,32], index: 7, kind: input, shape index: {}]
  %s8 = inlined_call_operand.vmem [shape: f32[1,32], index: 8, kind: input, shape index: {}]
  %s9 = inlined_call_operand.vmem [shape: bf16[32,32], index: 9, kind: input, shape index: {}]
  %s10 = inlined_call_operand.vmem [shape: f32[1,32], index: 10, kind: input, shape index: {}]
  %s11 = inlined_call_operand.vmem [shape: f32[1,32], index: 11, kind: input, shape index: {}]
  %s12 = inlined_call_operand.vmem [shape: f32[1,32], index: 12, kind: input, shape index: {}]
  %s13 = inlined_call_operand.vmem [shape: bf16[32,128], index: 13, kind: input, shape index: {}]
  %s14 = inlined_call_operand.vmem [shape: f32[1,128], index: 14, kind: input, shape index: {}]
  %s15 = inlined_call_operand.vmem [shape: bf16[128,32], index: 15, kind: input, shape index: {}]
  %s16 = inlined_call_operand.vmem [shape: f32[1,32], index: 16, kind: input, shape index: {}]
  %s17 = inlined_call_operand.vmem [shape: f32[1,32], index: 17, kind: input, shape index: {}]
  %s18 = inlined_call_operand.vmem [shape: f32[1,32], index: 18, kind: input, shape index: {}]
  %s19 = inlined_call_operand.hbm [shape: f32[16,32], index: 19, kind: output, shape index: {}]
  %s20 = sld [smem:[#allocation0]]
  $region86: #{tpu_custom_call.1} parent=0
    _
  %s22 = ssub.s32 1, %s20
  %s23 = scalar_select 0, %s22, %s20
  $region1: #{tpu_custom_call.1} parent=0
    #allocation2 [shape = 'u8[8192]{0}', space=vmem, size = 0x2000, scoped, tag = 'output window, operand 0, single buffered']
    #allocation3 [shape = 's32[1]{0}', space=sflag, size = 0x4, scoped, tag = 'scoped memory for tpu_custom_call.1']
    %24 = vsyncpa [#allocation3], 0
    // Predicated region
    $region2: #{tpu_custom_call.1} parent=1 // pred_check
      _
    $region3: #{tpu_custom_call.1} parent=1 // pred_check_branch
      %26 = sbr.rel (0) target = $region5
    $region4: #{tpu_custom_call.1} parent=1 // pred_region
      _
    $region5: #{tpu_custom_call.1} parent=1 // pred_fallthru
      _
    // Predicated region
    $region6: #{tpu_custom_call.1} parent=1 // pred_check
      _
    $region7: #{tpu_custom_call.1} parent=1 // pred_check_branch
      %28 = sbr.rel (0) target = $region9
    $region8: #{tpu_custom_call.1} parent=1 // pred_region
      _
    $region9: #{tpu_custom_call.1} parent=1 // pred_fallthru
      _
    // Predicated region
    $region10: #{tpu_custom_call.1} parent=1 // pred_check
      _
    $region11: #{tpu_custom_call.1} parent=1 // pred_check_branch
      %30 = sbr.rel (0) target = $region13
    $region12: #{tpu_custom_call.1} parent=1 // pred_region
      _
    $region13: #{tpu_custom_call.1} parent=1 // pred_fallthru
      _
    // Predicated region
    $region14: #{tpu_custom_call.1} parent=1 // pred_check
      _
    $region15: #{tpu_custom_call.1} parent=1 // pred_check_branch
      %32 = sbr.rel (0) target = $region17
    $region16: #{tpu_custom_call.1} parent=1 // pred_region
      _
    $region17: #{tpu_custom_call.1} parent=1 // pred_fallthru
      _
    // Predicated region
    $region18: #{tpu_custom_call.1} parent=1 // pred_check
      _
    $region19: #{tpu_custom_call.1} parent=1 // pred_check_branch
      %34 = sbr.rel (0) target = $region21
    $region20: #{tpu_custom_call.1} parent=1 // pred_region
      _
    $region21: #{tpu_custom_call.1} parent=1 // pred_fallthru
      _
    // Predicated region
    $region22: #{tpu_custom_call.1} parent=1 // pred_check
      _
    $region23: #{tpu_custom_call.1} parent=1 // pred_check_branch
      %36 = sbr.rel (0) target = $region25
    $region24: #{tpu_custom_call.1} parent=1 // pred_region
      _
    $region25: #{tpu_custom_call.1} parent=1 // pred_fallthru
      _
    // Predicated region
    $region26: #{tpu_custom_call.1} parent=1 // pred_check
      _
    $region27: #{tpu_custom_call.1} parent=1 // pred_check_branch
      %38 = sbr.rel (0) target = $region29
    $region28: #{tpu_custom_call.1} parent=1 // pred_region
      _
    $region29: #{tpu_custom_call.1} parent=1 // pred_fallthru
      _
    // Predicated region
    $region30: #{tpu_custom_call.1} parent=1 // pred_check
      _
    $region31: #{tpu_custom_call.1} parent=1 // pred_check_branch
      %40 = sbr.rel (0) target = $region33
    $region32: #{tpu_custom_call.1} parent=1 // pred_region
      _
    $region33: #{tpu_custom_call.1} parent=1 // pred_fallthru
      _
    // Predicated region
    $region34: #{tpu_custom_call.1} parent=1 // pred_check
      _
    $region35: #{tpu_custom_call.1} parent=1 // pred_check_branch
      %42 = sbr.rel (0) target = $region37
    $region36: #{tpu_custom_call.1} parent=1 // pred_region
      _
    $region37: #{tpu_custom_call.1} parent=1 // pred_fallthru
      _
    // Predicated region
    $region38: #{tpu_custom_call.1} parent=1 // pred_check
      _
    $region39: #{tpu_custom_call.1} parent=1 // pred_check_branch
      %44 = sbr.rel (0) target = $region41
    $region40: #{tpu_custom_call.1} parent=1 // pred_region
      _
    $region41: #{tpu_custom_call.1} parent=1 // pred_fallthru
      _
    // Predicated region
    $region42: #{tpu_custom_call.1} parent=1 // pred_check
      _
    $region43: #{tpu_custom_call.1} parent=1 // pred_check_branch
      %46 = sbr.rel (0) target = $region45
    $region44: #{tpu_custom_call.1} parent=1 // pred_region
      _
    $region45: #{tpu_custom_call.1} parent=1 // pred_fallthru
      _
    // Predicated region
    $region46: #{tpu_custom_call.1} parent=1 // pred_check
      _
    $region47: #{tpu_custom_call.1} parent=1 // pred_check_branch
      %48 = sbr.rel (0) target = $region49
    $region48: #{tpu_custom_call.1} parent=1 // pred_region
      _
    $region49: #{tpu_custom_call.1} parent=1 // pred_fallthru
      _
    // Predicated region
    $region50: #{tpu_custom_call.1} parent=1 // pred_check
      _
    $region51: #{tpu_custom_call.1} parent=1 // pred_check_branch
      %50 = sbr.rel (0) target = $region53
    $region52: #{tpu_custom_call.1} parent=1 // pred_region
      _
    $region53: #{tpu_custom_call.1} parent=1 // pred_fallthru
      _
    // Predicated region
    $region54: #{tpu_custom_call.1} parent=1 // pred_check
      _
    $region55: #{tpu_custom_call.1} parent=1 // pred_check_branch
      %52 = sbr.rel (0) target = $region57
    $region56: #{tpu_custom_call.1} parent=1 // pred_region
      _
    $region57: #{tpu_custom_call.1} parent=1 // pred_fallthru
      _
    // Predicated region
    $region58: #{tpu_custom_call.1} parent=1 // pred_check
      _
    $region59: #{tpu_custom_call.1} parent=1 // pred_check_branch
      %54 = sbr.rel (0) target = $region61
    $region60: #{tpu_custom_call.1} parent=1 // pred_region
      _
    $region61: #{tpu_custom_call.1} parent=1 // pred_fallthru
      _
    // Predicated region
    $region62: #{tpu_custom_call.1} parent=1 // pred_check
      _
    $region63: #{tpu_custom_call.1} parent=1 // pred_check_branch
      %56 = sbr.rel (0) target = $region65
    $region64: #{tpu_custom_call.1} parent=1 // pred_region
      _
    $region65: #{tpu_custom_call.1} parent=1 // pred_fallthru
      _
    // Predicated region
    $region66: #{tpu_custom_call.1} parent=1 // pred_check
      _
    $region67: #{tpu_custom_call.1} parent=1 // pred_check_branch
      %58 = sbr.rel (0) target = $region69
    $region68: #{tpu_custom_call.1} parent=1 // pred_region
      _
    $region69: #{tpu_custom_call.1} parent=1 // pred_fallthru
      _
    // Predicated region
    $region70: #{tpu_custom_call.1} parent=1 // pred_check
      _
    $region71: #{tpu_custom_call.1} parent=1 // pred_check_branch
      %60 = sbr.rel (0) target = $region73
    $region72: #{tpu_custom_call.1} parent=1 // pred_region
      _
    $region73: #{tpu_custom_call.1} parent=1 // pred_fallthru
      _
    // Predicated region
    $region74: #{tpu_custom_call.1} parent=1 // pred_check
      _
    $region75: #{tpu_custom_call.1} parent=1 // pred_check_branch
      %62 = sbr.rel (0) target = $region77
    $region76: #{tpu_custom_call.1} parent=1 // pred_region
      _
    $region77: #{tpu_custom_call.1} parent=1 // pred_fallthru
      _
    %v64 = vld [vmem:[%s0] sm:$0xf]
    %v65 = vld [vmem:[%s0 + $0x4] sm:$0xf]
    %v66 = vunpack.c.l.bf16 %v64
    %v67 = vunpack.c.l.bf16 %v65
    %v68 = vld [vmem:[%s1] sm:$0xff]
    %v69 = vld [vmem:[%s1 + $0x8] sm:$0xff]
    %v70 = vld [vmem:[%s2] sm:$0xff]
    %v71 = vld [vmem:[%s2 + $0x8] sm:$0xff]
    %v72 = vld [vmem:[%s4] sm:$0xf]
    %v73 = vld [vmem:[%s4 + $0x4] sm:$0xf]
    %v74 = vld [vmem:[%s4 + $0x8] sm:$0xf]
    %v75 = vld [vmem:[%s4 + $0xc] sm:$0xf]
    %v76 = vld [vmem:[%s6] sm:$0x1]
    %v78 = vlaneseq
    %v79 = vshrl.u32 %v78, 7
    %v80 = vsub.s32 0, %v79
    %v81 = vrot.slane %v76, %v80
    %v85 = vunpack.c.l.b16 %v64
    %v86 = vunpack.c.l.b16 %v65
    %v87 = vpack.c.b16 %v86, %v85
    %v92 = vunpack.c.l.b16 %v72
    %v93 = vunpack.c.l.b16 %v73
    %v94 = vunpack.c.l.b16 %v74
    %v95 = vunpack.c.l.b16 %v75
    %v96 = vpack.c.b16 %v93, %v92
    %v97 = vpack.c.b16 %v95, %v94
    %vm100 = vcmask 261120
    %v102 = vsel %vm100, %v87, 0
    %104 = vmatprep.subr.bf16.mxu0 0
    %105 = vmatpush1.bf16.msra.mxu0 0
    %106 = vmatprep.subr.bf16.mxu0 0
    %107 = vmatpush1.bf16.msra.mxu0 0
    %108 = vmatprep.subr.bf16.mxu0 0
    %109 = vmatpush1.bf16.msra.mxu0 0
    %110 = vmatprep.subr.bf16.mxu0 0
    %111 = vmatpush1.bf16.msra.mxu0 0
    %112 = vmatprep.subr.bf16.mxu0 0
    %113 = vmatpush1.bf16.msra.mxu0 0
    %114 = vmatprep.subr.bf16.mxu0 0
    %115 = vmatpush1.bf16.msra.mxu0 0
    %116 = vmatprep.subr.bf16.mxu0 0
    %117 = vmatpush1.bf16.msra.mxu0 %v97
    %118 = vmatprep.subr.bf16.mxu0 0
    %119 = vmatpush1.bf16.msra.mxu0 %v96
    %120 = vmatprep.subr.bf16.mxu0 0
    %121 = vmatpush2.bf16.msra.mxu0 0
    %122 = vmatprep.subr.bf16.mxu0 0
    %123 = vmatpush2.bf16.msra.mxu0 0
    %124 = vmatprep.subr.bf16.mxu0 0
    %125 = vmatpush2.bf16.msra.mxu0 0
    %126 = vmatprep.subr.bf16.mxu0 0
    %127 = vmatpush2.bf16.msra.mxu0 0
    %128 = vmatprep.subr.bf16.mxu0 0
    %129 = vmatpush2.bf16.msra.mxu0 0
    %130 = vmatprep.subr.bf16.mxu0 0
    %131 = vmatpush2.bf16.msra.mxu0 0
    %132 = vmatprep.subr.bf16.mxu0 0
    %133 = vmatpush2.bf16.msra.mxu0 0
    %134 = vmatprep.subr.bf16.mxu0 0
    %135 = vmatpush2.bf16.msra.mxu0 0
    %136 = vmatprep.mubr.bf16.mxu0 0
    %137 = vmatmul.mubr.bf16.gmra.mxu0 %v102
    %v138 = vpop.f32.mrf.mxu0
    %v139 = vadd.f32 %v81, %v138
    %v140 = vpop.f32.mrf.mxu0
    %v141 = vpop.f32.mrf.mxu0
    %v142 = vadd.f32 %v81, %v141
    %v143 = vpop.f32.mrf.mxu0
    %144 = vdwg.mxu0
    %v145 = vld [vmem:[%s5] sm:$0xf]
    %v146 = vld [vmem:[%s5 + $0x4] sm:$0xf]
    %v147 = vld [vmem:[%s5 + $0x8] sm:$0xf]
    %v148 = vld [vmem:[%s5 + $0xc] sm:$0xf]
    %v149 = vld [vmem:[%s5 + $0x10] sm:$0xf]
    %v150 = vld [vmem:[%s5 + $0x14] sm:$0xf]
    %v151 = vld [vmem:[%s5 + $0x18] sm:$0xf]
    %v152 = vld [vmem:[%s5 + $0x1c] sm:$0xf]
    %v155 = vunpack.c.l.b16 %v68
    %v156 = vunpack.c.l.b16 %v69
    %v157 = vpack.c.b16 %v156, %v155
    %v166 = vunpack.c.l.b16 %v145
    %v167 = vunpack.c.l.b16 %v146
    %v168 = vunpack.c.l.b16 %v147
    %v169 = vunpack.c.l.b16 %v148
    %v170 = vunpack.c.l.b16 %v149
    %v171 = vunpack.c.l.b16 %v150
    %v172 = vunpack.c.l.b16 %v151
    %v173 = vunpack.c.l.b16 %v152
    %v174 = vpack.c.b16 %v167, %v166
    %v175 = vpack.c.b16 %v169, %v168
    %v176 = vpack.c.b16 %v171, %v170
    %v177 = vpack.c.b16 %v173, %v172
    %vm182 = vcmask 523264
    %v184 = vsel %vm182, %v157, 0
    %186 = vmatprep.subr.bf16.mxu0 0
    %187 = vmatpush1.bf16.msra.mxu0 0
    %188 = vmatprep.subr.bf16.mxu0 0
    %189 = vmatpush1.bf16.msra.mxu0 0
    %190 = vmatprep.subr.bf16.mxu0 0
    %191 = vmatpush1.bf16.msra.mxu0 0
    %192 = vmatprep.subr.bf16.mxu0 0
    %193 = vmatpush1.bf16.msra.mxu0 0
    %194 = vmatprep.subr.bf16.mxu0 0
    %195 = vmatpush1.bf16.msra.mxu0 %v177
    %196 = vmatprep.subr.bf16.mxu0 0
    %197 = vmatpush1.bf16.msra.mxu0 %v176
    %198 = vmatprep.subr.bf16.mxu0 0
    %199 = vmatpush1.bf16.msra.mxu0 %v175
    %200 = vmatprep.subr.bf16.mxu0 0
    %201 = vmatpush1.bf16.msra.mxu0 %v174
    %202 = vmatprep.subr.bf16.mxu0 0
    %203 = vmatpush2.bf16.msra.mxu0 0
    %204 = vmatprep.subr.bf16.mxu0 0
    %205 = vmatpush2.bf16.msra.mxu0 0
    %206 = vmatprep.subr.bf16.mxu0 0
    %207 = vmatpush2.bf16.msra.mxu0 0
    %208 = vmatprep.subr.bf16.mxu0 0
    %209 = vmatpush2.bf16.msra.mxu0 0
    %210 = vmatprep.subr.bf16.mxu0 0
    %211 = vmatpush2.bf16.msra.mxu0 0
    %212 = vmatprep.subr.bf16.mxu0 0
    %213 = vmatpush2.bf16.msra.mxu0 0
    %214 = vmatprep.subr.bf16.mxu0 0
    %215 = vmatpush2.bf16.msra.mxu0 0
    %216 = vmatprep.subr.bf16.mxu0 0
    %217 = vmatpush2.bf16.msra.mxu0 0
    %218 = vmatprep.mubr.bf16.mxu0 0
    %219 = vmatmul.mubr.bf16.gmra.mxu0 %v184
    %v220 = vpop.f32.mrf.mxu0
    %v221 = vadd.f32 %v139, %v220
    %v222 = vpop.f32.mrf.mxu0
    %v223 = vpop.f32.mrf.mxu0
    %v224 = vadd.f32 %v142, %v223
    %v225 = vpop.f32.mrf.mxu0
    %226 = vdwg.mxu0
    %v227 = vmul.f32 %v221, 0.5
    %v228 = vmul.f32 %v224, 0.5
    %v229 = vmul.f32 %v221, 0.70710677
    %v230 = vmul.f32 %v224, 0.70710677
    %v231 = verf.f32.pop %v229
    %v232 = verf.f32.pop %v230
    %v233 = vadd.f32 %v231, 1.0
    %v234 = vadd.f32 %v232, 1.0
    %v235 = vmul.f32 %v227, %v233
    %v236 = vmul.f32 %v228, %v234
    %v237 = vpack.c.bf16 %v236, %v235
    %v238 = vld [vmem:[%s7] sm:$0xf]
    %v239 = vld [vmem:[%s7 + $0x4] sm:$0xf]
    %v240 = vld [vmem:[%s7 + $0x8] sm:$0xf]
    %v241 = vld [vmem:[%s7 + $0xc] sm:$0xf]
    %v242 = vld [vmem:[%s8] sm:$0x1]
    %v244 = vlaneseq
    %v245 = vshrl.u32 %v244, 7
    %v246 = vsub.s32 0, %v245
    %v247 = vrot.slane %v242, %v246
    %v253 = vunpack.c.l.b16 %v238
    %v254 = vunpack.c.l.b16 %v239
    %v255 = vunpack.c.l.b16 %v240
    %v256 = vunpack.c.l.b16 %v241
    %v257 = vpack.c.b16 %v254, %v253
    %v258 = vpack.c.b16 %v256, %v255
    %v262 = vsel %vm100, %v237, 0
    %264 = vmatprep.subr.bf16.mxu0 0
    %265 = vmatpush1.bf16.msra.mxu0 0
    %266 = vmatprep.subr.bf16.mxu0 0
    %267 = vmatpush1.bf16.msra.mxu0 0
    %268 = vmatprep.subr.bf16.mxu0 0
    %269 = vmatpush1.bf16.msra.mxu0 0
    %270 = vmatprep.subr.bf16.mxu0 0
    %271 = vmatpush1.bf16.msra.mxu0 0
    %272 = vmatprep.subr.bf16.mxu0 0
    %273 = vmatpush1.bf16.msra.mxu0 0
    %274 = vmatprep.subr.bf16.mxu0 0
    %275 = vmatpush1.bf16.msra.mxu0 0
    %276 = vmatprep.subr.bf16.mxu0 0
    %277 = vmatpush1.bf16.msra.mxu0 %v258
    %278 = vmatprep.subr.bf16.mxu0 0
    %279 = vmatpush1.bf16.msra.mxu0 %v257
    %280 = vmatprep.subr.bf16.mxu0 0
    %281 = vmatpush2.bf16.msra.mxu0 0
    %282 = vmatprep.subr.bf16.mxu0 0
    %283 = vmatpush2.bf16.msra.mxu0 0
    %284 = vmatprep.subr.bf16.mxu0 0
    %285 = vmatpush2.bf16.msra.mxu0 0
    %286 = vmatprep.subr.bf16.mxu0 0
    %287 = vmatpush2.bf16.msra.mxu0 0
    %288 = vmatprep.subr.bf16.mxu0 0
    %289 = vmatpush2.bf16.msra.mxu0 0
    %290 = vmatprep.subr.bf16.mxu0 0
    %291 = vmatpush2.bf16.msra.mxu0 0
    %292 = vmatprep.subr.bf16.mxu0 0
    %293 = vmatpush2.bf16.msra.mxu0 0
    %294 = vmatprep.subr.bf16.mxu0 0
    %295 = vmatpush2.bf16.msra.mxu0 0
    %296 = vmatprep.mubr.bf16.mxu0 0
    %297 = vmatmul.mubr.bf16.gmra.mxu0 %v262
    %v298 = vpop.f32.mrf.mxu0
    %v299 = vadd.f32 %v247, %v298
    %v300 = vpop.f32.mrf.mxu0
    %v301 = vpop.f32.mrf.mxu0
    %v302 = vadd.f32 %v247, %v301
    %v303 = vpop.f32.mrf.mxu0
    %304 = vdwg.mxu0
    %v305 = vmul.f32 %v299, 0.5
    %v306 = vmul.f32 %v302, 0.5
    %v307 = vmul.f32 %v299, 0.70710677
    %v308 = vmul.f32 %v302, 0.70710677
    %v309 = verf.f32.pop %v307
    %v310 = verf.f32.pop %v308
    %v311 = vadd.f32 %v309, 1.0
    %v312 = vadd.f32 %v310, 1.0
    %v313 = vmul.f32 %v305, %v311
    %v314 = vmul.f32 %v306, %v312
    %v315 = vpack.c.bf16 %v314, %v313
    %v316 = vld [vmem:[%s9] sm:$0xf]
    %v317 = vld [vmem:[%s9 + $0x4] sm:$0xf]
    %v318 = vld [vmem:[%s9 + $0x8] sm:$0xf]
    %v319 = vld [vmem:[%s9 + $0xc] sm:$0xf]
    %v320 = vld [vmem:[%s10] sm:$0x1]
    %v322 = vlaneseq
    %v323 = vshrl.u32 %v322, 7
    %v324 = vsub.s32 0, %v323
    %v325 = vrot.slane %v320, %v324
    %v331 = vunpack.c.l.b16 %v316
    %v332 = vunpack.c.l.b16 %v317
    %v333 = vunpack.c.l.b16 %v318
    %v334 = vunpack.c.l.b16 %v319
    %v335 = vpack.c.b16 %v332, %v331
    %v336 = vpack.c.b16 %v334, %v333
    %v340 = vsel %vm100, %v315, 0
    %342 = vmatprep.subr.bf16.mxu0 0
    %343 = vmatpush1.bf16.msra.mxu0 0
    %344 = vmatprep.subr.bf16.mxu0 0
    %345 = vmatpush1.bf16.msra.mxu0 0
    %346 = vmatprep.subr.bf16.mxu0 0
    %347 = vmatpush1.bf16.msra.mxu0 0
    %348 = vmatprep.subr.bf16.mxu0 0
    %349 = vmatpush1.bf16.msra.mxu0 0
    %350 = vmatprep.subr.bf16.mxu0 0
    %351 = vmatpush1.bf16.msra.mxu0 0
    %352 = vmatprep.subr.bf16.mxu0 0
    %353 = vmatpush1.bf16.msra.mxu0 0
    %354 = vmatprep.subr.bf16.mxu0 0
    %355 = vmatpush1.bf16.msra.mxu0 %v336
    %356 = vmatprep.subr.bf16.mxu0 0
    %357 = vmatpush1.bf16.msra.mxu0 %v335
    %358 = vmatprep.subr.bf16.mxu0 0
    %359 = vmatpush2.bf16.msra.mxu0 0
    %360 = vmatprep.subr.bf16.mxu0 0
    %361 = vmatpush2.bf16.msra.mxu0 0
    %362 = vmatprep.subr.bf16.mxu0 0
    %363 = vmatpush2.bf16.msra.mxu0 0
    %364 = vmatprep.subr.bf16.mxu0 0
    %365 = vmatpush2.bf16.msra.mxu0 0
    %366 = vmatprep.subr.bf16.mxu0 0
    %367 = vmatpush2.bf16.msra.mxu0 0
    %368 = vmatprep.subr.bf16.mxu0 0
    %369 = vmatpush2.bf16.msra.mxu0 0
    %370 = vmatprep.subr.bf16.mxu0 0
    %371 = vmatpush2.bf16.msra.mxu0 0
    %372 = vmatprep.subr.bf16.mxu0 0
    %373 = vmatpush2.bf16.msra.mxu0 0
    %374 = vmatprep.mubr.bf16.mxu0 0
    %375 = vmatmul.mubr.bf16.gmra.mxu0 %v340
    %v376 = vpop.f32.mrf.mxu0
    %v377 = vadd.f32 %v325, %v376
    %v378 = vpop.f32.mrf.mxu0
    %v379 = vpop.f32.mrf.mxu0
    %v380 = vadd.f32 %v325, %v379
    %v381 = vpop.f32.mrf.mxu0
    %382 = vdwg.mxu0
    %384 = vset.pattern.permute.xlu0 0
    %385 = vperm.xlu0 %384, %v70
    %v386 = vpop.permute.xlu0 %385
    %389 = vset.pattern.permute.xlu0 0
    %390 = vperm.xlu0 %389, %v71
    %v391 = vpop.permute.xlu0 %390
    %v393 = vmul.f32 %v377, %v386
    %v394 = vmul.f32 %v380, %v391
    %v395 = vadd.f32 %v393, 0.0
    %v396 = vadd.f32 %v394, 0.0
    %397 = vrot.lane.b32.xlu0 %v157, 64
    %v398 = vpop.permute.xlu0 %397
    %v400 = vsel %vm182, %v398, 0
    %402 = vmatprep.subr.bf16.mxu0 0
    %403 = vmatpush1.bf16.msra.mxu0 0
    %404 = vmatprep.subr.bf16.mxu0 0
    %405 = vmatpush1.bf16.msra.mxu0 0
    %406 = vmatprep.subr.bf16.mxu0 0
    %407 = vmatpush1.bf16.msra.mxu0 0
    %408 = vmatprep.subr.bf16.mxu0 0
    %409 = vmatpush1.bf16.msra.mxu0 0
    %410 = vmatprep.subr.bf16.mxu0 0
    %411 = vmatpush1.bf16.msra.mxu0 %v177
    %412 = vmatprep.subr.bf16.mxu0 0
    %413 = vmatpush1.bf16.msra.mxu0 %v176
    %414 = vmatprep.subr.bf16.mxu0 0
    %415 = vmatpush1.bf16.msra.mxu0 %v175
    %416 = vmatprep.subr.bf16.mxu0 0
    %417 = vmatpush1.bf16.msra.mxu0 %v174
    %418 = vmatprep.subr.bf16.mxu0 0
    %419 = vmatpush2.bf16.msra.mxu0 0
    %420 = vmatprep.subr.bf16.mxu0 0
    %421 = vmatpush2.bf16.msra.mxu0 0
    %422 = vmatprep.subr.bf16.mxu0 0
    %423 = vmatpush2.bf16.msra.mxu0 0
    %424 = vmatprep.subr.bf16.mxu0 0
    %425 = vmatpush2.bf16.msra.mxu0 0
    %426 = vmatprep.subr.bf16.mxu0 0
    %427 = vmatpush2.bf16.msra.mxu0 0
    %428 = vmatprep.subr.bf16.mxu0 0
    %429 = vmatpush2.bf16.msra.mxu0 0
    %430 = vmatprep.subr.bf16.mxu0 0
    %431 = vmatpush2.bf16.msra.mxu0 0
    %432 = vmatprep.subr.bf16.mxu0 0
    %433 = vmatpush2.bf16.msra.mxu0 0
    %434 = vmatprep.mubr.bf16.mxu0 0
    %435 = vmatmul.mubr.bf16.gmra.mxu0 %v400
    %v436 = vpop.f32.mrf.mxu0
    %v437 = vadd.f32 %v139, %v436
    %v438 = vpop.f32.mrf.mxu0
    %v439 = vpop.f32.mrf.mxu0
    %v440 = vadd.f32 %v142, %v439
    %v441 = vpop.f32.mrf.mxu0
    %442 = vdwg.mxu0
    %v443 = vmul.f32 %v437, 0.5
    %v444 = vmul.f32 %v440, 0.5
    %v445 = vmul.f32 %v437, 0.70710677
    %v446 = vmul.f32 %v440, 0.70710677
    %v447 = verf.f32.pop %v445
    %v448 = verf.f32.pop %v446
    %v449 = vadd.f32 %v447, 1.0
    %v450 = vadd.f32 %v448, 1.0
    %v451 = vmul.f32 %v443, %v449
    %v452 = vmul.f32 %v444, %v450
    %v453 = vpack.c.bf16 %v452, %v451
    %v455 = vsel %vm100, %v453, 0
    %457 = vmatprep.subr.bf16.mxu0 0
    %458 = vmatpush1.bf16.msra.mxu0 0
    %459 = vmatprep.subr.bf16.mxu0 0
    %460 = vmatpush1.bf16.msra.mxu0 0
    %461 = vmatprep.subr.bf16.mxu0 0
    %462 = vmatpush1.bf16.msra.mxu0 0
    %463 = vmatprep.subr.bf16.mxu0 0
    %464 = vmatpush1.bf16.msra.mxu0 0
    %465 = vmatprep.subr.bf16.mxu0 0
    %466 = vmatpush1.bf16.msra.mxu0 0
    %467 = vmatprep.subr.bf16.mxu0 0
    %468 = vmatpush1.bf16.msra.mxu0 0
    %469 = vmatprep.subr.bf16.mxu0 0
    %470 = vmatpush1.bf16.msra.mxu0 %v258
    %471 = vmatprep.subr.bf16.mxu0 0
    %472 = vmatpush1.bf16.msra.mxu0 %v257
    %473 = vmatprep.subr.bf16.mxu0 0
    %474 = vmatpush2.bf16.msra.mxu0 0
    %475 = vmatprep.subr.bf16.mxu0 0
    %476 = vmatpush2.bf16.msra.mxu0 0
    %477 = vmatprep.subr.bf16.mxu0 0
    %478 = vmatpush2.bf16.msra.mxu0 0
    %479 = vmatprep.subr.bf16.mxu0 0
    %480 = vmatpush2.bf16.msra.mxu0 0
    %481 = vmatprep.subr.bf16.mxu0 0
    %482 = vmatpush2.bf16.msra.mxu0 0
    %483 = vmatprep.subr.bf16.mxu0 0
    %484 = vmatpush2.bf16.msra.mxu0 0
    %485 = vmatprep.subr.bf16.mxu0 0
    %486 = vmatpush2.bf16.msra.mxu0 0
    %487 = vmatprep.subr.bf16.mxu0 0
    %488 = vmatpush2.bf16.msra.mxu0 0
    %489 = vmatprep.mubr.bf16.mxu0 0
    %490 = vmatmul.mubr.bf16.gmra.mxu0 %v455
    %v491 = vpop.f32.mrf.mxu0
    %v492 = vadd.f32 %v247, %v491
    %v493 = vpop.f32.mrf.mxu0
    %v494 = vpop.f32.mrf.mxu0
    %v495 = vadd.f32 %v247, %v494
    %v496 = vpop.f32.mrf.mxu0
    %497 = vdwg.mxu0
    %v498 = vmul.f32 %v492, 0.5
    %v499 = vmul.f32 %v495, 0.5
    %v500 = vmul.f32 %v492, 0.70710677
    %v501 = vmul.f32 %v495, 0.70710677
    %v502 = verf.f32.pop %v500
    %v503 = verf.f32.pop %v501
    %v504 = vadd.f32 %v502, 1.0
    %v505 = vadd.f32 %v503, 1.0
    %v506 = vmul.f32 %v498, %v504
    %v507 = vmul.f32 %v499, %v505
    %v508 = vpack.c.bf16 %v507, %v506
    %v510 = vsel %vm100, %v508, 0
    %512 = vmatprep.subr.bf16.mxu0 0
    %513 = vmatpush1.bf16.msra.mxu0 0
    %514 = vmatprep.subr.bf16.mxu0 0
    %515 = vmatpush1.bf16.msra.mxu0 0
    %516 = vmatprep.subr.bf16.mxu0 0
    %517 = vmatpush1.bf16.msra.mxu0 0
    %518 = vmatprep.subr.bf16.mxu0 0
    %519 = vmatpush1.bf16.msra.mxu0 0
    %520 = vmatprep.subr.bf16.mxu0 0
    %521 = vmatpush1.bf16.msra.mxu0 0
    %522 = vmatprep.subr.bf16.mxu0 0
    %523 = vmatpush1.bf16.msra.mxu0 0
    %524 = vmatprep.subr.bf16.mxu0 0
    %525 = vmatpush1.bf16.msra.mxu0 %v336
    %526 = vmatprep.subr.bf16.mxu0 0
    %527 = vmatpush1.bf16.msra.mxu0 %v335
    %528 = vmatprep.subr.bf16.mxu0 0
    %529 = vmatpush2.bf16.msra.mxu0 0
    %530 = vmatprep.subr.bf16.mxu0 0
    %531 = vmatpush2.bf16.msra.mxu0 0
    %532 = vmatprep.subr.bf16.mxu0 0
    %533 = vmatpush2.bf16.msra.mxu0 0
    %534 = vmatprep.subr.bf16.mxu0 0
    %535 = vmatpush2.bf16.msra.mxu0 0
    %536 = vmatprep.subr.bf16.mxu0 0
    %537 = vmatpush2.bf16.msra.mxu0 0
    %538 = vmatprep.subr.bf16.mxu0 0
    %539 = vmatpush2.bf16.msra.mxu0 0
    %540 = vmatprep.subr.bf16.mxu0 0
    %541 = vmatpush2.bf16.msra.mxu0 0
    %542 = vmatprep.subr.bf16.mxu0 0
    %543 = vmatpush2.bf16.msra.mxu0 0
    %544 = vmatprep.mubr.bf16.mxu0 0
    %545 = vmatmul.mubr.bf16.gmra.mxu0 %v510
    %v546 = vpop.f32.mrf.mxu0
    %v547 = vadd.f32 %v325, %v546
    %v548 = vpop.f32.mrf.mxu0
    %v549 = vpop.f32.mrf.mxu0
    %v550 = vadd.f32 %v325, %v549
    %v551 = vpop.f32.mrf.mxu0
    %552 = vdwg.mxu0
    %553 = vset.pattern.permute.xlu0 1
    %554 = vperm.xlu0 %553, %v70
    %v555 = vpop.permute.xlu0 %554
    %557 = vset.pattern.permute.xlu0 1
    %558 = vperm.xlu0 %557, %v71
    %v559 = vpop.permute.xlu0 %558
    %v561 = vmul.f32 %v547, %v555
    %v562 = vmul.f32 %v550, %v559
    %v563 = vadd.f32 %v395, %v561
    %v564 = vadd.f32 %v396, %v562
    %v565 = vunpack.c.h.b16 %v68
    %v566 = vunpack.c.h.b16 %v69
    %v567 = vpack.c.b16 %v566, %v565
    %v569 = vsel %vm182, %v567, 0
    %571 = vmatprep.subr.bf16.mxu0 0
    %572 = vmatpush1.bf16.msra.mxu0 0
    %573 = vmatprep.subr.bf16.mxu0 0
    %574 = vmatpush1.bf16.msra.mxu0 0
    %575 = vmatprep.subr.bf16.mxu0 0
    %576 = vmatpush1.bf16.msra.mxu0 0
    %577 = vmatprep.subr.bf16.mxu0 0
    %578 = vmatpush1.bf16.msra.mxu0 0
    %579 = vmatprep.subr.bf16.mxu0 0
    %580 = vmatpush1.bf16.msra.mxu0 %v177
    %581 = vmatprep.subr.bf16.mxu0 0
    %582 = vmatpush1.bf16.msra.mxu0 %v176
    %583 = vmatprep.subr.bf16.mxu0 0
    %584 = vmatpush1.bf16.msra.mxu0 %v175
    %585 = vmatprep.subr.bf16.mxu0 0
    %586 = vmatpush1.bf16.msra.mxu0 %v174
    %587 = vmatprep.subr.bf16.mxu0 0
    %588 = vmatpush2.bf16.msra.mxu0 0
    %589 = vmatprep.subr.bf16.mxu0 0
    %590 = vmatpush2.bf16.msra.mxu0 0
    %591 = vmatprep.subr.bf16.mxu0 0
    %592 = vmatpush2.bf16.msra.mxu0 0
    %593 = vmatprep.subr.bf16.mxu0 0
    %594 = vmatpush2.bf16.msra.mxu0 0
    %595 = vmatprep.subr.bf16.mxu0 0
    %596 = vmatpush2.bf16.msra.mxu0 0
    %597 = vmatprep.subr.bf16.mxu0 0
    %598 = vmatpush2.bf16.msra.mxu0 0
    %599 = vmatprep.subr.bf16.mxu0 0
    %600 = vmatpush2.bf16.msra.mxu0 0
    %601 = vmatprep.subr.bf16.mxu0 0
    %602 = vmatpush2.bf16.msra.mxu0 0
    %603 = vmatprep.mubr.bf16.mxu0 0
    %604 = vmatmul.mubr.bf16.gmra.mxu0 %v569
    %v605 = vpop.f32.mrf.mxu0
    %v606 = vadd.f32 %v139, %v605
    %v607 = vpop.f32.mrf.mxu0
    %v608 = vpop.f32.mrf.mxu0
    %v609 = vadd.f32 %v142, %v608
    %v610 = vpop.f32.mrf.mxu0
    %611 = vdwg.mxu0
    %v612 = vmul.f32 %v606, 0.5
    %v613 = vmul.f32 %v609, 0.5
    %v614 = vmul.f32 %v606, 0.70710677
    %v615 = vmul.f32 %v609, 0.70710677
    %v616 = verf.f32.pop %v614
    %v617 = verf.f32.pop %v615
    %v618 = vadd.f32 %v616, 1.0
    %v619 = vadd.f32 %v617, 1.0
    %v620 = vmul.f32 %v612, %v618
    %v621 = vmul.f32 %v613, %v619
    %v622 = vpack.c.bf16 %v621, %v620
    %v624 = vsel %vm100, %v622, 0
    %626 = vmatprep.subr.bf16.mxu0 0
    %627 = vmatpush1.bf16.msra.mxu0 0
    %628 = vmatprep.subr.bf16.mxu0 0
    %629 = vmatpush1.bf16.msra.mxu0 0
    %630 = vmatprep.subr.bf16.mxu0 0
    %631 = vmatpush1.bf16.msra.mxu0 0
    %632 = vmatprep.subr.bf16.mxu0 0
    %633 = vmatpush1.bf16.msra.mxu0 0
    %634 = vmatprep.subr.bf16.mxu0 0
    %635 = vmatpush1.bf16.msra.mxu0 0
    %636 = vmatprep.subr.bf16.mxu0 0
    %637 = vmatpush1.bf16.msra.mxu0 0
    %638 = vmatprep.subr.bf16.mxu0 0
    %639 = vmatpush1.bf16.msra.mxu0 %v258
    %640 = vmatprep.subr.bf16.mxu0 0
    %641 = vmatpush1.bf16.msra.mxu0 %v257
    %642 = vmatprep.subr.bf16.mxu0 0
    %643 = vmatpush2.bf16.msra.mxu0 0
    %644 = vmatprep.subr.bf16.mxu0 0
    %645 = vmatpush2.bf16.msra.mxu0 0
    %646 = vmatprep.subr.bf16.mxu0 0
    %647 = vmatpush2.bf16.msra.mxu0 0
    %648 = vmatprep.subr.bf16.mxu0 0
    %649 = vmatpush2.bf16.msra.mxu0 0
    %650 = vmatprep.subr.bf16.mxu0 0
    %651 = vmatpush2.bf16.msra.mxu0 0
    %652 = vmatprep.subr.bf16.mxu0 0
    %653 = vmatpush2.bf16.msra.mxu0 0
    %654 = vmatprep.subr.bf16.mxu0 0
    %655 = vmatpush2.bf16.msra.mxu0 0
    %656 = vmatprep.subr.bf16.mxu0 0
    %657 = vmatpush2.bf16.msra.mxu0 0
    %658 = vmatprep.mubr.bf16.mxu0 0
    %659 = vmatmul.mubr.bf16.gmra.mxu0 %v624
    %v660 = vpop.f32.mrf.mxu0
    %v661 = vadd.f32 %v247, %v660
    %v662 = vpop.f32.mrf.mxu0
    %v663 = vpop.f32.mrf.mxu0
    %v664 = vadd.f32 %v247, %v663
    %v665 = vpop.f32.mrf.mxu0
    %666 = vdwg.mxu0
    %v667 = vmul.f32 %v661, 0.5
    %v668 = vmul.f32 %v664, 0.5
    %v669 = vmul.f32 %v661, 0.70710677
    %v670 = vmul.f32 %v664, 0.70710677
    %v671 = verf.f32.pop %v669
    %v672 = verf.f32.pop %v670
    %v673 = vadd.f32 %v671, 1.0
    %v674 = vadd.f32 %v672, 1.0
    %v675 = vmul.f32 %v667, %v673
    %v676 = vmul.f32 %v668, %v674
    %v677 = vpack.c.bf16 %v676, %v675
    %v679 = vsel %vm100, %v677, 0
    %681 = vmatprep.subr.bf16.mxu0 0
    %682 = vmatpush1.bf16.msra.mxu0 0
    %683 = vmatprep.subr.bf16.mxu0 0
    %684 = vmatpush1.bf16.msra.mxu0 0
    %685 = vmatprep.subr.bf16.mxu0 0
    %686 = vmatpush1.bf16.msra.mxu0 0
    %687 = vmatprep.subr.bf16.mxu0 0
    %688 = vmatpush1.bf16.msra.mxu0 0
    %689 = vmatprep.subr.bf16.mxu0 0
    %690 = vmatpush1.bf16.msra.mxu0 0
    %691 = vmatprep.subr.bf16.mxu0 0
    %692 = vmatpush1.bf16.msra.mxu0 0
    %693 = vmatprep.subr.bf16.mxu0 0
    %694 = vmatpush1.bf16.msra.mxu0 %v336
    %695 = vmatprep.subr.bf16.mxu0 0
    %696 = vmatpush1.bf16.msra.mxu0 %v335
    %697 = vmatprep.subr.bf16.mxu0 0
    %698 = vmatpush2.bf16.msra.mxu0 0
    %699 = vmatprep.subr.bf16.mxu0 0
    %700 = vmatpush2.bf16.msra.mxu0 0
    %701 = vmatprep.subr.bf16.mxu0 0
    %702 = vmatpush2.bf16.msra.mxu0 0
    %703 = vmatprep.subr.bf16.mxu0 0
    %704 = vmatpush2.bf16.msra.mxu0 0
    %705 = vmatprep.subr.bf16.mxu0 0
    %706 = vmatpush2.bf16.msra.mxu0 0
    %707 = vmatprep.subr.bf16.mxu0 0
    %708 = vmatpush2.bf16.msra.mxu0 0
    %709 = vmatprep.subr.bf16.mxu0 0
    %710 = vmatpush2.bf16.msra.mxu0 0
    %711 = vmatprep.subr.bf16.mxu0 0
    %712 = vmatpush2.bf16.msra.mxu0 0
    %713 = vmatprep.mubr.bf16.mxu0 0
    %714 = vmatmul.mubr.bf16.gmra.mxu0 %v679
    %v715 = vpop.f32.mrf.mxu0
    %v716 = vadd.f32 %v325, %v715
    %v717 = vpop.f32.mrf.mxu0
    %v718 = vpop.f32.mrf.mxu0
    %v719 = vadd.f32 %v325, %v718
    %v720 = vpop.f32.mrf.mxu0
    %721 = vdwg.mxu0
    %722 = vset.pattern.permute.xlu0 2
    %723 = vperm.xlu0 %722, %v70
    %v724 = vpop.permute.xlu0 %723
    %726 = vset.pattern.permute.xlu0 2
    %727 = vperm.xlu0 %726, %v71
    %v728 = vpop.permute.xlu0 %727
    %v730 = vmul.f32 %v716, %v724
    %v731 = vmul.f32 %v719, %v728
    %v732 = vadd.f32 %v563, %v730
    %v733 = vadd.f32 %v564, %v731
    %734 = vrot.lane.b32.xlu0 %v567, 64
    %v735 = vpop.permute.xlu0 %734
    %v737 = vsel %vm182, %v735, 0
    %739 = vmatprep.subr.bf16.mxu0 0
    %740 = vmatpush1.bf16.msra.mxu0 0
    %741 = vmatprep.subr.bf16.mxu0 0
    %742 = vmatpush1.bf16.msra.mxu0 0
    %743 = vmatprep.subr.bf16.mxu0 0
    %744 = vmatpush1.bf16.msra.mxu0 0
    %745 = vmatprep.subr.bf16.mxu0 0
    %746 = vmatpush1.bf16.msra.mxu0 0
    %747 = vmatprep.subr.bf16.mxu0 0
    %748 = vmatpush1.bf16.msra.mxu0 %v177
    %749 = vmatprep.subr.bf16.mxu0 0
    %750 = vmatpush1.bf16.msra.mxu0 %v176
    %751 = vmatprep.subr.bf16.mxu0 0
    %752 = vmatpush1.bf16.msra.mxu0 %v175
    %753 = vmatprep.subr.bf16.mxu0 0
    %754 = vmatpush1.bf16.msra.mxu0 %v174
    %755 = vmatprep.subr.bf16.mxu0 0
    %756 = vmatpush2.bf16.msra.mxu0 0
    %757 = vmatprep.subr.bf16.mxu0 0
    %758 = vmatpush2.bf16.msra.mxu0 0
    %759 = vmatprep.subr.bf16.mxu0 0
    %760 = vmatpush2.bf16.msra.mxu0 0
    %761 = vmatprep.subr.bf16.mxu0 0
    %762 = vmatpush2.bf16.msra.mxu0 0
    %763 = vmatprep.subr.bf16.mxu0 0
    %764 = vmatpush2.bf16.msra.mxu0 0
    %765 = vmatprep.subr.bf16.mxu0 0
    %766 = vmatpush2.bf16.msra.mxu0 0
    %767 = vmatprep.subr.bf16.mxu0 0
    %768 = vmatpush2.bf16.msra.mxu0 0
    %769 = vmatprep.subr.bf16.mxu0 0
    %770 = vmatpush2.bf16.msra.mxu0 0
    %771 = vmatprep.mubr.bf16.mxu0 0
    %772 = vmatmul.mubr.bf16.gmra.mxu0 %v737
    %v773 = vpop.f32.mrf.mxu0
    %v774 = vadd.f32 %v139, %v773
    %v775 = vpop.f32.mrf.mxu0
    %v776 = vpop.f32.mrf.mxu0
    %v777 = vadd.f32 %v142, %v776
    %v778 = vpop.f32.mrf.mxu0
    %779 = vdwg.mxu0
    %v780 = vmul.f32 %v774, 0.5
    %v781 = vmul.f32 %v777, 0.5
    %v782 = vmul.f32 %v774, 0.70710677
    %v783 = vmul.f32 %v777, 0.70710677
    %v784 = verf.f32.pop %v782
    %v785 = verf.f32.pop %v783
    %v786 = vadd.f32 %v784, 1.0
    %v787 = vadd.f32 %v785, 1.0
    %v788 = vmul.f32 %v780, %v786
    %v789 = vmul.f32 %v781, %v787
    %v790 = vpack.c.bf16 %v789, %v788
    %v792 = vsel %vm100, %v790, 0
    %794 = vmatprep.subr.bf16.mxu0 0
    %795 = vmatpush1.bf16.msra.mxu0 0
    %796 = vmatprep.subr.bf16.mxu0 0
    %797 = vmatpush1.bf16.msra.mxu0 0
    %798 = vmatprep.subr.bf16.mxu0 0
    %799 = vmatpush1.bf16.msra.mxu0 0
    %800 = vmatprep.subr.bf16.mxu0 0
    %801 = vmatpush1.bf16.msra.mxu0 0
    %802 = vmatprep.subr.bf16.mxu0 0
    %803 = vmatpush1.bf16.msra.mxu0 0
    %804 = vmatprep.subr.bf16.mxu0 0
    %805 = vmatpush1.bf16.msra.mxu0 0
    %806 = vmatprep.subr.bf16.mxu0 0
    %807 = vmatpush1.bf16.msra.mxu0 %v258
    %808 = vmatprep.subr.bf16.mxu0 0
    %809 = vmatpush1.bf16.msra.mxu0 %v257
    %810 = vmatprep.subr.bf16.mxu0 0
    %811 = vmatpush2.bf16.msra.mxu0 0
    %812 = vmatprep.subr.bf16.mxu0 0
    %813 = vmatpush2.bf16.msra.mxu0 0
    %814 = vmatprep.subr.bf16.mxu0 0
    %815 = vmatpush2.bf16.msra.mxu0 0
    %816 = vmatprep.subr.bf16.mxu0 0
    %817 = vmatpush2.bf16.msra.mxu0 0
    %818 = vmatprep.subr.bf16.mxu0 0
    %819 = vmatpush2.bf16.msra.mxu0 0
    %820 = vmatprep.subr.bf16.mxu0 0
    %821 = vmatpush2.bf16.msra.mxu0 0
    %822 = vmatprep.subr.bf16.mxu0 0
    %823 = vmatpush2.bf16.msra.mxu0 0
    %824 = vmatprep.subr.bf16.mxu0 0
    %825 = vmatpush2.bf16.msra.mxu0 0
    %826 = vmatprep.mubr.bf16.mxu0 0
    %827 = vmatmul.mubr.bf16.gmra.mxu0 %v792
    %v828 = vpop.f32.mrf.mxu0
    %v829 = vadd.f32 %v247, %v828
    %v830 = vpop.f32.mrf.mxu0
    %v831 = vpop.f32.mrf.mxu0
    %v832 = vadd.f32 %v247, %v831
    %v833 = vpop.f32.mrf.mxu0
    %834 = vdwg.mxu0
    %v835 = vmul.f32 %v829, 0.5
    %v836 = vmul.f32 %v832, 0.5
    %v837 = vmul.f32 %v829, 0.70710677
    %v838 = vmul.f32 %v832, 0.70710677
    %v839 = verf.f32.pop %v837
    %v840 = verf.f32.pop %v838
    %v841 = vadd.f32 %v839, 1.0
    %v842 = vadd.f32 %v840, 1.0
    %v843 = vmul.f32 %v835, %v841
    %v844 = vmul.f32 %v836, %v842
    %v845 = vpack.c.bf16 %v844, %v843
    %v847 = vsel %vm100, %v845, 0
    %849 = vmatprep.subr.bf16.mxu0 0
    %850 = vmatpush1.bf16.msra.mxu0 0
    %851 = vmatprep.subr.bf16.mxu0 0
    %852 = vmatpush1.bf16.msra.mxu0 0
    %853 = vmatprep.subr.bf16.mxu0 0
    %854 = vmatpush1.bf16.msra.mxu0 0
    %855 = vmatprep.subr.bf16.mxu0 0
    %856 = vmatpush1.bf16.msra.mxu0 0
    %857 = vmatprep.subr.bf16.mxu0 0
    %858 = vmatpush1.bf16.msra.mxu0 0
    %859 = vmatprep.subr.bf16.mxu0 0
    %860 = vmatpush1.bf16.msra.mxu0 0
    %861 = vmatprep.subr.bf16.mxu0 0
    %862 = vmatpush1.bf16.msra.mxu0 %v336
    %863 = vmatprep.subr.bf16.mxu0 0
    %864 = vmatpush1.bf16.msra.mxu0 %v335
    %865 = vmatprep.subr.bf16.mxu0 0
    %866 = vmatpush2.bf16.msra.mxu0 0
    %867 = vmatprep.subr.bf16.mxu0 0
    %868 = vmatpush2.bf16.msra.mxu0 0
    %869 = vmatprep.subr.bf16.mxu0 0
    %870 = vmatpush2.bf16.msra.mxu0 0
    %871 = vmatprep.subr.bf16.mxu0 0
    %872 = vmatpush2.bf16.msra.mxu0 0
    %873 = vmatprep.subr.bf16.mxu0 0
    %874 = vmatpush2.bf16.msra.mxu0 0
    %875 = vmatprep.subr.bf16.mxu0 0
    %876 = vmatpush2.bf16.msra.mxu0 0
    %877 = vmatprep.subr.bf16.mxu0 0
    %878 = vmatpush2.bf16.msra.mxu0 0
    %879 = vmatprep.subr.bf16.mxu0 0
    %880 = vmatpush2.bf16.msra.mxu0 0
    %881 = vmatprep.mubr.bf16.mxu0 0
    %882 = vmatmul.mubr.bf16.gmra.mxu0 %v847
    %v883 = vpop.f32.mrf.mxu0
    %v884 = vadd.f32 %v325, %v883
    %v885 = vpop.f32.mrf.mxu0
    %v886 = vpop.f32.mrf.mxu0
    %v887 = vadd.f32 %v325, %v886
    %v888 = vpop.f32.mrf.mxu0
    %889 = vdwg.mxu0
    %890 = vset.pattern.permute.xlu0 3
    %891 = vperm.xlu0 %890, %v70
    %v892 = vpop.permute.xlu0 %891
    %894 = vset.pattern.permute.xlu0 3
    %895 = vperm.xlu0 %894, %v71
    %v896 = vpop.permute.xlu0 %895
    %v898 = vmul.f32 %v884, %v892
    %v899 = vmul.f32 %v887, %v896
    %v900 = vadd.f32 %v732, %v898
    %v901 = vadd.f32 %v733, %v899
    %v902 = vmul.f32 %v900, 0.033333335
    %v903 = vmul.f32 %v901, 0.033333335
    %v904 = vadd.f32 %v66, %v902
    %v905 = vadd.f32 %v67, %v903
    %v906 = vld [vmem:[%s11] sm:$0x1]
    %v907 = vld [vmem:[%s12] sm:$0x1]
    %v908 = vsel %vm100, %v904, 0.0
    %909 = vadd.xlane.f32.xlu0 %v908
    %v910 = vpop.xlane.xlu0 %909
    %v911 = vsel %vm100, %v905, 0.0
    %912 = vadd.xlane.f32.xlu0 %v911
    %v913 = vpop.xlane.xlu0 %912
    %v914 = vrcp.pop 32.0
    %v915 = vmul.f32 %v910, %v914
    %v916 = vmul.f32 %v913, %v914
    %v917 = vsub.f32 %v904, %v915
    %v918 = vsub.f32 %v905, %v916
    %v919 = vmul.f32 %v917, %v917
    %v920 = vmul.f32 %v918, %v918
    %v921 = vsel %vm100, %v919, 0.0
    %922 = vadd.xlane.f32.xlu0 %v921
    %v923 = vpop.xlane.xlu0 %922
    %v924 = vsel %vm100, %v920, 0.0
    %925 = vadd.xlane.f32.xlu0 %v924
    %v926 = vpop.xlane.xlu0 %925
    %v927 = vmul.f32 %v923, %v914
    %v928 = vmul.f32 %v926, %v914
    %v929 = vadd.f32 %v927, 1e-05
    %v930 = vadd.f32 %v928, 1e-05
    %v931 = vrsqrt.pop %v929
    %v932 = vrsqrt.pop %v930
    %v933 = vmul.f32 %v917, %v931
    %v934 = vmul.f32 %v918, %v932
    %v936 = vlaneseq
    %v937 = vshrl.u32 %v936, 7
    %v938 = vsub.s32 0, %v937
    %v939 = vrot.slane %v906, %v938
    %v941 = vmul.f32 %v933, %v939
    %v942 = vmul.f32 %v934, %v939
    %v944 = vlaneseq
    %v945 = vshrl.u32 %v944, 7
    %v946 = vsub.s32 0, %v945
    %v947 = vrot.slane %v907, %v946
    %v949 = vadd.f32 %v941, %v947
    %v950 = vadd.f32 %v942, %v947
    %v951 = vpack.c.bf16 %v950, %v949
    %v952 = vld [vmem:[%s13] sm:$0xf]
    %v953 = vld [vmem:[%s13 + $0x4] sm:$0xf]
    %v954 = vld [vmem:[%s13 + $0x8] sm:$0xf]
    %v955 = vld [vmem:[%s13 + $0xc] sm:$0xf]
    %v956 = vld [vmem:[%s14] sm:$0x1]
    %v958 = vlaneseq
    %v959 = vshrl.u32 %v958, 7
    %v960 = vsub.s32 0, %v959
    %v961 = vrot.slane %v956, %v960
    %v967 = vunpack.c.l.b16 %v952
    %v968 = vunpack.c.l.b16 %v953
    %v969 = vunpack.c.l.b16 %v954
    %v970 = vunpack.c.l.b16 %v955
    %v971 = vpack.c.b16 %v968, %v967
    %v972 = vpack.c.b16 %v970, %v969
    %v976 = vsel %vm100, %v951, 0
    %978 = vmatprep.subr.bf16.mxu0 0
    %979 = vmatpush1.bf16.msra.mxu0 0
    %980 = vmatprep.subr.bf16.mxu0 0
    %981 = vmatpush1.bf16.msra.mxu0 0
    %982 = vmatprep.subr.bf16.mxu0 0
    %983 = vmatpush1.bf16.msra.mxu0 0
    %984 = vmatprep.subr.bf16.mxu0 0
    %985 = vmatpush1.bf16.msra.mxu0 0
    %986 = vmatprep.subr.bf16.mxu0 0
    %987 = vmatpush1.bf16.msra.mxu0 0
    %988 = vmatprep.subr.bf16.mxu0 0
    %989 = vmatpush1.bf16.msra.mxu0 0
    %990 = vmatprep.subr.bf16.mxu0 0
    %991 = vmatpush1.bf16.msra.mxu0 %v972
    %992 = vmatprep.subr.bf16.mxu0 0
    %993 = vmatpush1.bf16.msra.mxu0 %v971
    %994 = vmatprep.subr.bf16.mxu0 0
    %995 = vmatpush2.bf16.msra.mxu0 0
    %996 = vmatprep.subr.bf16.mxu0 0
    %997 = vmatpush2.bf16.msra.mxu0 0
    %998 = vmatprep.subr.bf16.mxu0 0
    %999 = vmatpush2.bf16.msra.mxu0 0
    %1000 = vmatprep.subr.bf16.mxu0 0
    %1001 = vmatpush2.bf16.msra.mxu0 0
    %1002 = vmatprep.subr.bf16.mxu0 0
    %1003 = vmatpush2.bf16.msra.mxu0 0
    %1004 = vmatprep.subr.bf16.mxu0 0
    %1005 = vmatpush2.bf16.msra.mxu0 0
    %1006 = vmatprep.subr.bf16.mxu0 0
    %1007 = vmatpush2.bf16.msra.mxu0 0
    %1008 = vmatprep.subr.bf16.mxu0 0
    %1009 = vmatpush2.bf16.msra.mxu0 0
    %1010 = vmatprep.mubr.bf16.mxu0 0
    %1011 = vmatmul.mubr.bf16.gmra.mxu0 %v976
    %v1012 = vpop.f32.mrf.mxu0
    %v1013 = vadd.f32 %v961, %v1012
    %v1014 = vpop.f32.mrf.mxu0
    %v1015 = vpop.f32.mrf.mxu0
    %v1016 = vadd.f32 %v961, %v1015
    %v1017 = vpop.f32.mrf.mxu0
    %1018 = vdwg.mxu0
    %v1019 = vmul.f32 %v1013, 0.5
    %v1020 = vmul.f32 %v1016, 0.5
    %v1021 = vmul.f32 %v1013, 0.70710677
    %v1022 = vmul.f32 %v1016, 0.70710677
    %v1023 = verf.f32.pop %v1021
    %v1024 = verf.f32.pop %v1022
    %v1025 = vadd.f32 %v1023, 1.0
    %v1026 = vadd.f32 %v1024, 1.0
    %v1027 = vmul.f32 %v1019, %v1025
    %v1028 = vmul.f32 %v1020, %v1026
    %v1029 = vpack.c.bf16 %v1028, %v1027
    %v1030 = vld [vmem:[%s15] sm:$0xf]
    %v1031 = vld [vmem:[%s15 + $0x4] sm:$0xf]
    %v1032 = vld [vmem:[%s15 + $0x8] sm:$0xf]
    %v1033 = vld [vmem:[%s15 + $0xc] sm:$0xf]
    %v1034 = vld [vmem:[%s15 + $0x10] sm:$0xf]
    %v1035 = vld [vmem:[%s15 + $0x14] sm:$0xf]
    %v1036 = vld [vmem:[%s15 + $0x18] sm:$0xf]
    %v1037 = vld [vmem:[%s15 + $0x1c] sm:$0xf]
    %v1038 = vld [vmem:[%s15 + $0x20] sm:$0xf]
    %v1039 = vld [vmem:[%s15 + $0x24] sm:$0xf]
    %v1040 = vld [vmem:[%s15 + $0x28] sm:$0xf]
    %v1041 = vld [vmem:[%s15 + $0x2c] sm:$0xf]
    %v1042 = vld [vmem:[%s15 + $0x30] sm:$0xf]
    %v1043 = vld [vmem:[%s15 + $0x34] sm:$0xf]
    %v1044 = vld [vmem:[%s15 + $0x38] sm:$0xf]
    %v1045 = vld [vmem:[%s15 + $0x3c] sm:$0xf]
    %v1046 = vld [vmem:[%s16] sm:$0x1]
    %v1048 = vlaneseq
    %v1049 = vshrl.u32 %v1048, 7
    %v1050 = vsub.s32 0, %v1049
    %v1051 = vrot.slane %v1046, %v1050
    %v1069 = vunpack.c.l.b16 %v1030
    %v1070 = vunpack.c.l.b16 %v1031
    %v1071 = vunpack.c.l.b16 %v1032
    %v1072 = vunpack.c.l.b16 %v1033
    %v1073 = vunpack.c.l.b16 %v1034
    %v1074 = vunpack.c.l.b16 %v1035
    %v1075 = vunpack.c.l.b16 %v1036
    %v1076 = vunpack.c.l.b16 %v1037
    %v1077 = vunpack.c.l.b16 %v1038
    %v1078 = vunpack.c.l.b16 %v1039
    %v1079 = vunpack.c.l.b16 %v1040
    %v1080 = vunpack.c.l.b16 %v1041
    %v1081 = vunpack.c.l.b16 %v1042
    %v1082 = vunpack.c.l.b16 %v1043
    %v1083 = vunpack.c.l.b16 %v1044
    %v1084 = vunpack.c.l.b16 %v1045
    %v1085 = vpack.c.b16 %v1070, %v1069
    %v1086 = vpack.c.b16 %v1072, %v1071
    %v1087 = vpack.c.b16 %v1074, %v1073
    %v1088 = vpack.c.b16 %v1076, %v1075
    %v1089 = vpack.c.b16 %v1078, %v1077
    %v1090 = vpack.c.b16 %v1080, %v1079
    %v1091 = vpack.c.b16 %v1082, %v1081
    %v1092 = vpack.c.b16 %v1084, %v1083
    %1101 = vmatprep.subr.bf16.mxu0 0
    %1102 = vmatpush1.bf16.msra.mxu0 %v1092
    %1103 = vmatprep.subr.bf16.mxu0 0
    %1104 = vmatpush1.bf16.msra.mxu0 %v1091
    %1105 = vmatprep.subr.bf16.mxu0 0
    %1106 = vmatpush1.bf16.msra.mxu0 %v1090
    %1107 = vmatprep.subr.bf16.mxu0 0
    %1108 = vmatpush1.bf16.msra.mxu0 %v1089
    %1109 = vmatprep.subr.bf16.mxu0 0
    %1110 = vmatpush1.bf16.msra.mxu0 %v1088
    %1111 = vmatprep.subr.bf16.mxu0 0
    %1112 = vmatpush1.bf16.msra.mxu0 %v1087
    %1113 = vmatprep.subr.bf16.mxu0 0
    %1114 = vmatpush1.bf16.msra.mxu0 %v1086
    %1115 = vmatprep.subr.bf16.mxu0 0
    %1116 = vmatpush1.bf16.msra.mxu0 %v1085
    %1117 = vmatprep.subr.bf16.mxu0 0
    %1118 = vmatpush2.bf16.msra.mxu0 0
    %1119 = vmatprep.subr.bf16.mxu0 0
    %1120 = vmatpush2.bf16.msra.mxu0 0
    %1121 = vmatprep.subr.bf16.mxu0 0
    %1122 = vmatpush2.bf16.msra.mxu0 0
    %1123 = vmatprep.subr.bf16.mxu0 0
    %1124 = vmatpush2.bf16.msra.mxu0 0
    %1125 = vmatprep.subr.bf16.mxu0 0
    %1126 = vmatpush2.bf16.msra.mxu0 0
    %1127 = vmatprep.subr.bf16.mxu0 0
    %1128 = vmatpush2.bf16.msra.mxu0 0
    %1129 = vmatprep.subr.bf16.mxu0 0
    %1130 = vmatpush2.bf16.msra.mxu0 0
    %1131 = vmatprep.subr.bf16.mxu0 0
    %1132 = vmatpush2.bf16.msra.mxu0 0
    %1133 = vmatprep.mubr.bf16.mxu0 0
    %1134 = vmatmul.mubr.bf16.gmra.mxu0 %v1029
    %v1135 = vpop.f32.mrf.mxu0
    %v1136 = vadd.f32 %v1051, %v1135
    %v1137 = vpop.f32.mrf.mxu0
    %v1138 = vpop.f32.mrf.mxu0
    %v1139 = vadd.f32 %v1051, %v1138
    %v1140 = vpop.f32.mrf.mxu0
    %1141 = vdwg.mxu0
    %v1142 = vadd.f32 %v949, %v1136
    %v1143 = vadd.f32 %v950, %v1139
    %v1144 = vld [vmem:[%s17] sm:$0x1]
    %v1145 = vld [vmem:[%s18] sm:$0x1]
    %v1146 = vsel %vm100, %v1142, 0.0
    %1147 = vadd.xlane.f32.xlu0 %v1146
    %v1148 = vpop.xlane.xlu0 %1147
    %v1149 = vsel %vm100, %v1143, 0.0
    %1150 = vadd.xlane.f32.xlu0 %v1149
    %v1151 = vpop.xlane.xlu0 %1150
    %v1152 = vmul.f32 %v1148, %v914
    %v1153 = vmul.f32 %v1151, %v914
    %v1154 = vsub.f32 %v1142, %v1152
    %v1155 = vsub.f32 %v1143, %v1153
    %v1156 = vmul.f32 %v1154, %v1154
    %v1157 = vmul.f32 %v1155, %v1155
    %v1158 = vsel %vm100, %v1156, 0.0
    %1159 = vadd.xlane.f32.xlu0 %v1158
    %v1160 = vpop.xlane.xlu0 %1159
    %v1161 = vsel %vm100, %v1157, 0.0
    %1162 = vadd.xlane.f32.xlu0 %v1161
    %v1163 = vpop.xlane.xlu0 %1162
    %v1164 = vmul.f32 %v1160, %v914
    %v1165 = vmul.f32 %v1163, %v914
    %v1166 = vadd.f32 %v1164, 1e-05
    %v1167 = vadd.f32 %v1165, 1e-05
    %v1168 = vrsqrt.pop %v1166
    %v1169 = vrsqrt.pop %v1167
    %v1170 = vmul.f32 %v1154, %v1168
    %v1171 = vmul.f32 %v1155, %v1169
    %v1173 = vlaneseq
    %v1174 = vshrl.u32 %v1173, 7
    %v1175 = vsub.s32 0, %v1174
    %v1176 = vrot.slane %v1144, %v1175
    %v1178 = vmul.f32 %v1170, %v1176
    %v1179 = vmul.f32 %v1171, %v1176
    %v1181 = vlaneseq
    %v1182 = vshrl.u32 %v1181, 7
    %v1183 = vsub.s32 0, %v1182
    %v1184 = vrot.slane %v1145, %v1183
    %v1186 = vadd.f32 %v1178, %v1184
    %v1187 = vadd.f32 %v1179, %v1184
    %v1188 = vld [vmem:[%s3] sm:$0xff]
    %v1189 = vld [vmem:[%s3 + $0x8] sm:$0xff]
    %1191 = vset.pattern.permute.xlu0 0
    %1192 = vperm.xlu0 %1191, %v1188
    %v1193 = vpop.permute.xlu0 %1192
    %1196 = vset.pattern.permute.xlu0 0
    %1197 = vperm.xlu0 %1196, %v1189
    %v1198 = vpop.permute.xlu0 %1197
    %v1200 = vmul.f32 %v1186, %v1193
    %v1201 = vmul.f32 %v1187, %v1198
    %1202 = vst.msk [vmem:[#allocation2] sm:$0xff] %vm100, %v1200
    %1203 = vst.msk [vmem:[#allocation2 + $0x8] sm:$0xff] %vm100, %v1201
    // Predicated region
    $region78: #{tpu_custom_call.1} parent=1 // pred_check
      _
    $region79: #{tpu_custom_call.1} parent=1 // pred_check_branch
      %1205 = sbr.rel (0) target = $region81
    $region80: #{tpu_custom_call.1} parent=1 // pred_region
      %s1207 = ssub.s32 256, 256
      %1208 = vsyncadd [#allocation3], %s1207
      %s1209 = sshll.u32 [#allocation2], 4
      %s1210 = int_to_ptr.vmem [resolvable:$true] %s1209
      %1215 = dma.vmem_to_hbm [thread:$0]  %s1210, 256, %s19, [#allocation3], 128, 128, 8
    $region81: #{tpu_custom_call.1} parent=1 // pred_fallthru
      _
    // Predicated region
    $region82: #{tpu_custom_call.1} parent=1 // pred_check
      _
    $region83: #{tpu_custom_call.1} parent=1 // pred_check_branch
      %1217 = sbr.rel (0) target = $region85
    $region84: #{tpu_custom_call.1} parent=1 // pred_region
      %1218 = dma.done [#allocation3], 256
    $region85: #{tpu_custom_call.1} parent=1 // pred_fallthru
      _
    %1219 = vsyncpa [#allocation3], 1

</llo_original>
